<compile_context>
chip_gen: v6e
topology: v6e:2x2x1
jax: 0.10.0
libtpu: 0.0.40
codegen_flags: <defaults>
</compile_context>

<pallas_src>
import math

import jax
import jax.numpy as jnp
from jax.experimental import pallas as pl
from jax.experimental.pallas import tpu as pltpu


def _sigmoid(z):
    # 1 / (1 + exp(-z)) with the reciprocal on the EUP (approx) — free slot during this phase.
    return pl.reciprocal(1.0 + jnp.exp(-z), approx=True)


def make_lstm_decoder_kernel(n_layers, hidden_dim):
    H = hidden_dim

    def kernel(*refs):
        # inputs
        x_ref, h_ref, c_ref = refs[0], refs[1], refs[2]
        layer_refs = refs[3:3 + 3 * n_layers]          # (w_ih, w_hh, bias) per layer
        fcw_ref = refs[3 + 3 * n_layers]               # (H, Vt) bf16
        fcb_ref = refs[4 + 3 * n_layers]               # (1, Vt) f32
        # outputs
        pred_ref = refs[5 + 3 * n_layers]              # (B, Vt) f32
        hout_ref = refs[6 + 3 * n_layers]              # (L, B, H) f32
        cout_ref = refs[7 + 3 * n_layers]              # (L, B, H) f32
        # scratch
        htop_ref = refs[8 + 3 * n_layers]              # (B, H) f32, persists across grid

        # ---- run the LSTM stack once (first vocab tile only) --------------------
        @pl.when(pl.program_id(0) == 0)
        def _lstm_stack():
            # TODO(synk): nn.Dropout on the embedded input / between layers is
            # stochastic; treated as identity (eval mode).
            x = x_ref[...].astype(jnp.float32)                      # (B, E)
            for l in range(n_layers):                               # static unroll (small L)
                w_ih = layer_refs[3 * l][...]                       # (in, 4H) bf16
                w_hh = layer_refs[3 * l + 1][...]                   # (H, 4H)  bf16
                bias = layer_refs[3 * l + 2][...]                   # (1, 4H)  f32
                h_prev = h_ref[l]                                   # (B, H) f32
                c_prev = c_ref[l]                                   # (B, H) f32

                gates = (jnp.dot(x.astype(jnp.bfloat16), w_ih,
                                 preferred_element_type=jnp.float32)
                         + jnp.dot(h_prev.astype(jnp.bfloat16), w_hh,
                                   preferred_element_type=jnp.float32)
                         + bias)                                    # (B, 4H) f32

                # PyTorch LSTM gate order: i, f, g, o
                i_g = _sigmoid(gates[:, 0 * H:1 * H])
                f_g = _sigmoid(gates[:, 1 * H:2 * H])
                g_g = jnp.tanh(gates[:, 2 * H:3 * H])
                o_g = _sigmoid(gates[:, 3 * H:4 * H])

                c_new = f_g * c_prev + i_g * g_g
                h_new = o_g * jnp.tanh(c_new)

                hout_ref[l] = h_new
                cout_ref[l] = c_new
                x = h_new                                           # feed next layer

            htop_ref[...] = x                                       # top-layer hidden

        # ---- vocab-tiled decoder matmul (every vocab tile) -----------------------
        pred_ref[...] = (jnp.dot(htop_ref[...].astype(jnp.bfloat16), fcw_ref[...],
                                 preferred_element_type=jnp.float32)
                         + fcb_ref[...])

    return kernel


def lstm_decoder_forward(trg, h, c, params, *, n_layers, hidden_dim):
    """trg: (B,) int32 token ids; h, c: (n_layers, B, hidden_dim) f32.
    Returns (prediction (B, vocab), h_new, c_new) like the PyTorch module."""
    B = trg.shape[0]
    V, E = params['emb'].shape
    H = hidden_dim
    L = n_layers

    # Embedding gather (plain-JAX glue); dropout = identity (eval).
    x = params['emb'][trg].astype(jnp.float32)                      # (B, E)

    # Pre-transpose / pre-cast weights so the kernel does plain bf16 x @ W on the MXU.
    layer_args = []
    for l in range(L):
        layer_args += [
            jnp.asarray(params['w_ih'][l]).T.astype(jnp.bfloat16),            # (in, 4H)
            jnp.asarray(params['w_hh'][l]).T.astype(jnp.bfloat16),            # (H, 4H)
            (params['b_ih'][l] + params['b_hh'][l]).reshape(1, 4 * H)
            .astype(jnp.float32),                                             # (1, 4H)
        ]
    fc_w = params['fc_w'].T.astype(jnp.bfloat16)                    # (H, V)
    fc_b = params['fc_b'].reshape(1, V).astype(jnp.float32)         # (1, V)

    # Vocab tiling: lane-dense tiles, grid axis over V so fc weight / logits stream.
    if V % 512 == 0:
        v_tile = 512
    elif V % 128 == 0:
        v_tile = 128
    else:
        v_tile = V
    n_vtiles = V // v_tile

    args = (x, h.astype(jnp.float32), c.astype(jnp.float32), *layer_args, fc_w, fc_b)

    def full_spec(a):
        return pl.BlockSpec(a.shape, lambda j, nd=a.ndim: (0,) * nd)

    in_specs = [full_spec(a) for a in args[:-2]] + [
        pl.BlockSpec((H, v_tile), lambda j: (0, j)),     # fc weight tile
        pl.BlockSpec((1, v_tile), lambda j: (0, j)),     # fc bias tile
    ]
    out_specs = [
        pl.BlockSpec((B, v_tile), lambda j: (0, j)),     # prediction tile (lane-dense)
        pl.BlockSpec((L, B, H), lambda j: (0, 0, 0)),    # h_new (written at j==0)
        pl.BlockSpec((L, B, H), lambda j: (0, 0, 0)),    # c_new (written at j==0)
    ]
    out_shape = (
        jax.ShapeDtypeStruct((B, V), jnp.float32),
        jax.ShapeDtypeStruct((L, B, H), jnp.float32),
        jax.ShapeDtypeStruct((L, B, H), jnp.float32),
    )

    # Cost estimate + explicit VMEM budget (tiny working set; generous headroom).
    flops = 2 * B * 4 * H * (E + (2 * L - 1) * H) + 2 * B * H * V
    transcendentals = 5 * B * L * H
    bytes_accessed = (sum(int(a.size) * a.dtype.itemsize for a in args)
                      + (B * V + 2 * L * B * H) * 4)
    vmem_limit = int(min(96 * 2**20, max(16 * 2**20, 8 * bytes_accessed)))

    kernel = make_lstm_decoder_kernel(L, H)
    pred, h_new, c_new = pl.pallas_call(
        kernel,
        out_shape=out_shape,
        grid=(n_vtiles,),
        in_specs=in_specs,
        out_specs=out_specs,
        scratch_shapes=[pltpu.VMEM((B, H), jnp.float32)],
        compiler_params=pltpu.CompilerParams(
            dimension_semantics=("arbitrary",),          # j>0 tiles depend on scratch from j==0
            vmem_limit_bytes=vmem_limit),
        cost_estimate=pl.CostEstimate(flops=flops,
                                      transcendentals=transcendentals,
                                      bytes_accessed=bytes_accessed),
    )(*args)
    return pred, h_new, c_new


def init_params(key, vocab_size, embedding_dim, hidden_dim, n_layers):
    """Deterministic synthetic parameters matching the PyTorch module's shapes."""
    V, E, H, L = vocab_size, embedding_dim, hidden_dim, n_layers
    keys = jax.random.split(key, 2 + 4 * L)
    s = 1.0 / math.sqrt(H)

    def u(k, shape, scale):
        return jax.random.uniform(k, shape, jnp.float32, -scale, scale)

    w_ih, w_hh, b_ih, b_hh = [], [], [], []
    ki = 2
    for l in range(L):
        in_dim = E if l == 0 else H
        w_ih.append(u(keys[ki], (4 * H, in_dim), s)); ki += 1
        w_hh.append(u(keys[ki], (4 * H, H), s)); ki += 1
        b_ih.append(u(keys[ki], (4 * H,), s) * 0.0 + 0.01)  # small deterministic bias
        b_hh.append(jnp.zeros((4 * H,), jnp.float32))

    return dict(
        emb=u(keys[0], (V, E), 0.1),
        fc_w=u(keys[1], (V, H), s),
        fc_b=jnp.zeros((V,), jnp.float32),
        w_ih=w_ih, w_hh=w_hh, b_ih=b_ih, b_hh=b_hh,
    )


def reference_forward(trg, h, c, params, *, n_layers, hidden_dim):
    """Pure-JAX f32 reference reproducing the PyTorch forward (eval mode)."""
    x = params['emb'][trg]                               # (B, E)
    h_out, c_out = [], []
    for l in range(n_layers):
        gates = (x @ params['w_ih'][l].T + params['b_ih'][l]
                 + h[l] @ params['w_hh'][l].T + params['b_hh'][l])
        i_g, f_g, g_g, o_g = jnp.split(gates, 4, axis=-1)
        i_g = jax.nn.sigmoid(i_g)
        f_g = jax.nn.sigmoid(f_g)
        g_g = jnp.tanh(g_g)
        o_g = jax.nn.sigmoid(o_g)
        c_new = f_g * c[l] + i_g * g_g
        h_new = o_g * jnp.tanh(c_new)
        h_out.append(h_new)
        c_out.append(c_new)
        x = h_new
    pred = x @ params['fc_w'].T + params['fc_b']
    return pred, jnp.stack(h_out), jnp.stack(c_out)


if __name__ == "__main__":
    vocab_size, embedding_dim, hidden_dim, n_layers = 256, 32, 64, 2
    B = 8

    key = jax.random.PRNGKey(0)
    k_par, k_trg, k_h, k_c = jax.random.split(key, 4)
    params = init_params(k_par, vocab_size, embedding_dim, hidden_dim, n_layers)

    trg = jax.random.randint(k_trg, (B,), 0, vocab_size, dtype=jnp.int32)
    h0 = jax.random.uniform(k_h, (n_layers, B, hidden_dim), jnp.float32, -0.1, 0.1)
    c0 = jax.random.uniform(k_c, (n_layers, B, hidden_dim), jnp.float32, -0.1, 0.1)

    pred, h1, c1 = lstm_decoder_forward(trg, h0, c0, params,
                                        n_layers=n_layers, hidden_dim=hidden_dim)
    pred, h1, c1 = jax.block_until_ready((pred, h1, c1))

    pred_ref, h_ref, c_ref = reference_forward(trg, h0, c0, params,
                                               n_layers=n_layers, hidden_dim=hidden_dim)
    assert pred.shape == (B, vocab_size)
    assert h1.shape == (n_layers, B, hidden_dim) and c1.shape == h1.shape
    # bf16 MXU inputs -> compare against the f32 reference with a modest tolerance.
    assert jnp.allclose(pred, pred_ref, atol=2e-2, rtol=2e-2), "prediction mismatch"
    assert jnp.allclose(h1, h_ref, atol=2e-2, rtol=2e-2), "hidden state mismatch"
    assert jnp.allclose(c1, c_ref, atol=2e-2, rtol=2e-2), "cell state mismatch"
    print("KERNEL_OK")
</pallas_src>

<mosaic_0001>
module attributes {stable_mosaic.version = 11 : i64} {
  func.func @kernel(%arg0: i32, %arg1: memref<8x32xf32, #tpu.memory_space<vmem>>, %arg2: memref<2x8x64xf32, #tpu.memory_space<vmem>>, %arg3: memref<2x8x64xf32, #tpu.memory_space<vmem>>, %arg4: memref<32x256xbf16, #tpu.memory_space<vmem>>, %arg5: memref<64x256xbf16, #tpu.memory_space<vmem>>, %arg6: memref<1x256xf32, #tpu.memory_space<vmem>>, %arg7: memref<64x256xbf16, #tpu.memory_space<vmem>>, %arg8: memref<64x256xbf16, #tpu.memory_space<vmem>>, %arg9: memref<1x256xf32, #tpu.memory_space<vmem>>, %arg10: memref<64x128xbf16, #tpu.memory_space<vmem>>, %arg11: memref<1x128xf32, #tpu.memory_space<vmem>>, %arg12: memref<8x128xf32, #tpu.memory_space<vmem>>, %arg13: memref<2x8x64xf32, #tpu.memory_space<vmem>>, %arg14: memref<2x8x64xf32, #tpu.memory_space<vmem>>, %arg15: memref<8x64xf32, #tpu.memory_space<vmem>>) attributes {dimension_semantics = [#tpu.dimension_semantics<arbitrary>], iteration_bounds = array<i64: 2>, scalar_prefetch = 0 : i64, scratch_operands = 1 : i64, tpu.core_type = #tpu.core_type<tc>, window_params = [{pipeline_mode = #tpu.pipeline_mode<synchronous>, transform_indices = @transform_0, window_bounds = array<i64: 8, 32>}, {pipeline_mode = #tpu.pipeline_mode<synchronous>, transform_indices = @transform_1, window_bounds = array<i64: 2, 8, 64>}, {pipeline_mode = #tpu.pipeline_mode<synchronous>, transform_indices = @transform_2, window_bounds = array<i64: 2, 8, 64>}, {pipeline_mode = #tpu.pipeline_mode<synchronous>, transform_indices = @transform_3, window_bounds = array<i64: 32, 256>}, {pipeline_mode = #tpu.pipeline_mode<synchronous>, transform_indices = @transform_4, window_bounds = array<i64: 64, 256>}, {pipeline_mode = #tpu.pipeline_mode<synchronous>, transform_indices = @transform_5, window_bounds = array<i64: 1, 256>}, {pipeline_mode = #tpu.pipeline_mode<synchronous>, transform_indices = @transform_6, window_bounds = array<i64: 64, 256>}, {pipeline_mode = #tpu.pipeline_mode<synchronous>, transform_indices = @transform_7, window_bounds = array<i64: 64, 256>}, {pipeline_mode = #tpu.pipeline_mode<synchronous>, transform_indices = @transform_8, window_bounds = array<i64: 1, 256>}, {transform_indices = @transform_9, window_bounds = array<i64: 64, 128>}, {transform_indices = @transform_10, window_bounds = array<i64: 1, 128>}, {transform_indices = @transform_11, window_bounds = array<i64: 8, 128>}, {pipeline_mode = #tpu.pipeline_mode<synchronous>, transform_indices = @transform_12, window_bounds = array<i64: 2, 8, 64>}, {pipeline_mode = #tpu.pipeline_mode<synchronous>, transform_indices = @transform_13, window_bounds = array<i64: 2, 8, 64>}]} {
    %c0_i32 = arith.constant 0 : i32
    %0 = arith.cmpi eq, %arg0, %c0_i32 : i32
    %1 = arith.extui %0 : i1 to i32
    %c0_i32_0 = arith.constant 0 : i32
    %2 = arith.cmpi ne, %1, %c0_i32_0 : i32
    scf.if %2 {
      %c0_8 = arith.constant 0 : index
      %c0_9 = arith.constant 0 : index
      %11 = vector.load %arg1[%c0_8, %c0_9] : memref<8x32xf32, #tpu.memory_space<vmem>>, vector<8x32xf32>
      %c0_10 = arith.constant 0 : index
      %c0_11 = arith.constant 0 : index
      %12 = vector.load %arg4[%c0_10, %c0_11] : memref<32x256xbf16, #tpu.memory_space<vmem>>, vector<32x256xbf16>
      %c0_12 = arith.constant 0 : index
      %c0_13 = arith.constant 0 : index
      %13 = vector.load %arg5[%c0_12, %c0_13] : memref<64x256xbf16, #tpu.memory_space<vmem>>, vector<64x256xbf16>
      %c0_14 = arith.constant 0 : index
      %c0_15 = arith.constant 0 : index
      %14 = vector.load %arg6[%c0_14, %c0_15] : memref<1x256xf32, #tpu.memory_space<vmem>>, vector<1x256xf32>
      %c0_16 = arith.constant 0 : index
      %c0_17 = arith.constant 0 : index
      %c0_18 = arith.constant 0 : index
      %15 = vector.load %arg2[%c0_16, %c0_17, %c0_18] : memref<2x8x64xf32, #tpu.memory_space<vmem>>, vector<1x8x64xf32>
      %16 = vector.shape_cast %15 : vector<1x8x64xf32> to vector<8x64xf32>
      %c0_19 = arith.constant 0 : index
      %c0_20 = arith.constant 0 : index
      %c0_21 = arith.constant 0 : index
      %17 = vector.load %arg3[%c0_19, %c0_20, %c0_21] : memref<2x8x64xf32, #tpu.memory_space<vmem>>, vector<1x8x64xf32>
      %18 = vector.shape_cast %17 : vector<1x8x64xf32> to vector<8x64xf32>
      %19 = arith.truncf %11 : vector<8x32xf32> to vector<8x32xbf16>
      %cst_22 = arith.constant dense<0.000000e+00> : vector<8x256xf32>
      %20 = tpu.matmul %19, %12, %cst_22 {dimension_numbers = #tpu.dot_dimension_numbers<[1], [0], [0], [1], [0, 0, 1, 1], [], []>} : vector<8x32xbf16>, vector<32x256xbf16>, vector<8x256xf32> -> vector<8x256xf32>
      %21 = arith.truncf %16 : vector<8x64xf32> to vector<8x64xbf16>
      %cst_23 = arith.constant dense<0.000000e+00> : vector<8x256xf32>
      %22 = tpu.matmul %21, %13, %cst_23 {dimension_numbers = #tpu.dot_dimension_numbers<[1], [0], [0], [1], [0, 0, 1, 1], [], []>} : vector<8x64xbf16>, vector<64x256xbf16>, vector<8x256xf32> -> vector<8x256xf32>
      %23 = arith.addf %20, %22 : vector<8x256xf32>
      %24 = vector.broadcast %14 : vector<1x256xf32> to vector<8x256xf32>
      %25 = arith.addf %23, %24 : vector<8x256xf32>
      %26 = vector.extract_strided_slice %25 {offsets = [0, 0], sizes = [8, 64], strides = [1, 1]} : vector<8x256xf32> to vector<8x64xf32>
      %cst_24 = arith.constant 0.000000e+00 : f32
      %27 = vector.broadcast %cst_24 : f32 to vector<8x64xf32>
      %28 = arith.subf %27, %26 : vector<8x64xf32>
      %29 = math.exp %28 : vector<8x64xf32>
      %cst_25 = arith.constant 1.000000e+00 : f32
      %30 = vector.broadcast %cst_25 : f32 to vector<8x64xf32>
      %31 = arith.addf %30, %29 : vector<8x64xf32>
      %32 = tpu.reciprocal %31 {approx = true} : vector<8x64xf32> -> vector<8x64xf32>
      %33 = vector.extract_strided_slice %25 {offsets = [0, 64], sizes = [8, 64], strides = [1, 1]} : vector<8x256xf32> to vector<8x64xf32>
      %cst_26 = arith.constant 0.000000e+00 : f32
      %34 = vector.broadcast %cst_26 : f32 to vector<8x64xf32>
      %35 = arith.subf %34, %33 : vector<8x64xf32>
      %36 = math.exp %35 : vector<8x64xf32>
      %cst_27 = arith.constant 1.000000e+00 : f32
      %37 = vector.broadcast %cst_27 : f32 to vector<8x64xf32>
      %38 = arith.addf %37, %36 : vector<8x64xf32>
      %39 = tpu.reciprocal %38 {approx = true} : vector<8x64xf32> -> vector<8x64xf32>
      %40 = vector.extract_strided_slice %25 {offsets = [0, 128], sizes = [8, 64], strides = [1, 1]} : vector<8x256xf32> to vector<8x64xf32>
      %41 = math.tanh %40 : vector<8x64xf32>
      %42 = vector.extract_strided_slice %25 {offsets = [0, 192], sizes = [8, 64], strides = [1, 1]} : vector<8x256xf32> to vector<8x64xf32>
      %cst_28 = arith.constant 0.000000e+00 : f32
      %43 = vector.broadcast %cst_28 : f32 to vector<8x64xf32>
      %44 = arith.subf %43, %42 : vector<8x64xf32>
      %45 = math.exp %44 : vector<8x64xf32>
      %cst_29 = arith.constant 1.000000e+00 : f32
      %46 = vector.broadcast %cst_29 : f32 to vector<8x64xf32>
      %47 = arith.addf %46, %45 : vector<8x64xf32>
      %48 = tpu.reciprocal %47 {approx = true} : vector<8x64xf32> -> vector<8x64xf32>
      %49 = arith.mulf %39, %18 : vector<8x64xf32>
      %50 = arith.mulf %32, %41 : vector<8x64xf32>
      %51 = arith.addf %49, %50 : vector<8x64xf32>
      %52 = math.tanh %51 : vector<8x64xf32>
      %53 = arith.mulf %48, %52 : vector<8x64xf32>
      %c0_30 = arith.constant 0 : index
      %c0_31 = arith.constant 0 : index
      %c0_32 = arith.constant 0 : index
      %54 = vector.load %arg13[%c0_30, %c0_31, %c0_32] : memref<2x8x64xf32, #tpu.memory_space<vmem>>, vector<1x8x64xf32>
      %55 = vector.shape_cast %54 : vector<1x8x64xf32> to vector<8x64xf32>
      %56 = vector.shape_cast %53 : vector<8x64xf32> to vector<1x8x64xf32>
      tpu.vector_store %arg13[%c0_30, %c0_31, %c0_32], %56 {strides = array<i32>} : memref<2x8x64xf32, #tpu.memory_space<vmem>>, vector<1x8x64xf32>,
      %c0_33 = arith.constant 0 : index
      %c0_34 = arith.constant 0 : index
      %c0_35 = arith.constant 0 : index
      %57 = vector.load %arg14[%c0_33, %c0_34, %c0_35] : memref<2x8x64xf32, #tpu.memory_space<vmem>>, vector<1x8x64xf32>
      %58 = vector.shape_cast %57 : vector<1x8x64xf32> to vector<8x64xf32>
      %59 = vector.shape_cast %51 : vector<8x64xf32> to vector<1x8x64xf32>
      tpu.vector_store %arg14[%c0_33, %c0_34, %c0_35], %59 {strides = array<i32>} : memref<2x8x64xf32, #tpu.memory_space<vmem>>, vector<1x8x64xf32>,
      %c0_36 = arith.constant 0 : index
      %c0_37 = arith.constant 0 : index
      %60 = vector.load %arg7[%c0_36, %c0_37] : memref<64x256xbf16, #tpu.memory_space<vmem>>, vector<64x256xbf16>
      %c0_38 = arith.constant 0 : index
      %c0_39 = arith.constant 0 : index
      %61 = vector.load %arg8[%c0_38, %c0_39] : memref<64x256xbf16, #tpu.memory_space<vmem>>, vector<64x256xbf16>
      %c0_40 = arith.constant 0 : index
      %c0_41 = arith.constant 0 : index
      %62 = vector.load %arg9[%c0_40, %c0_41] : memref<1x256xf32, #tpu.memory_space<vmem>>, vector<1x256xf32>
      %c1 = arith.constant 1 : index
      %c0_42 = arith.constant 0 : index
      %c0_43 = arith.constant 0 : index
      %63 = vector.load %arg2[%c1, %c0_42, %c0_43] : memref<2x8x64xf32, #tpu.memory_space<vmem>>, vector<1x8x64xf32>
      %64 = vector.shape_cast %63 : vector<1x8x64xf32> to vector<8x64xf32>
      %c1_44 = arith.constant 1 : index
      %c0_45 = arith.constant 0 : index
      %c0_46 = arith.constant 0 : index
      %65 = vector.load %arg3[%c1_44, %c0_45, %c0_46] : memref<2x8x64xf32, #tpu.memory_space<vmem>>, vector<1x8x64xf32>
      %66 = vector.shape_cast %65 : vector<1x8x64xf32> to vector<8x64xf32>
      %67 = arith.truncf %53 : vector<8x64xf32> to vector<8x64xbf16>
      %cst_47 = arith.constant dense<0.000000e+00> : vector<8x256xf32>
      %68 = tpu.matmul %67, %60, %cst_47 {dimension_numbers = #tpu.dot_dimension_numbers<[1], [0], [0], [1], [0, 0, 1, 1], [], []>} : vector<8x64xbf16>, vector<64x256xbf16>, vector<8x256xf32> -> vector<8x256xf32>
      %69 = arith.truncf %64 : vector<8x64xf32> to vector<8x64xbf16>
      %cst_48 = arith.constant dense<0.000000e+00> : vector<8x256xf32>
      %70 = tpu.matmul %69, %61, %cst_48 {dimension_numbers = #tpu.dot_dimension_numbers<[1], [0], [0], [1], [0, 0, 1, 1], [], []>} : vector<8x64xbf16>, vector<64x256xbf16>, vector<8x256xf32> -> vector<8x256xf32>
      %71 = arith.addf %68, %70 : vector<8x256xf32>
      %72 = vector.broadcast %62 : vector<1x256xf32> to vector<8x256xf32>
      %73 = arith.addf %71, %72 : vector<8x256xf32>
      %74 = vector.extract_strided_slice %73 {offsets = [0, 0], sizes = [8, 64], strides = [1, 1]} : vector<8x256xf32> to vector<8x64xf32>
      %cst_49 = arith.constant 0.000000e+00 : f32
      %75 = vector.broadcast %cst_49 : f32 to vector<8x64xf32>
      %76 = arith.subf %75, %74 : vector<8x64xf32>
      %77 = math.exp %76 : vector<8x64xf32>
      %cst_50 = arith.constant 1.000000e+00 : f32
      %78 = vector.broadcast %cst_50 : f32 to vector<8x64xf32>
      %79 = arith.addf %78, %77 : vector<8x64xf32>
      %80 = tpu.reciprocal %79 {approx = true} : vector<8x64xf32> -> vector<8x64xf32>
      %81 = vector.extract_strided_slice %73 {offsets = [0, 64], sizes = [8, 64], strides = [1, 1]} : vector<8x256xf32> to vector<8x64xf32>
      %cst_51 = arith.constant 0.000000e+00 : f32
      %82 = vector.broadcast %cst_51 : f32 to vector<8x64xf32>
      %83 = arith.subf %82, %81 : vector<8x64xf32>
      %84 = math.exp %83 : vector<8x64xf32>
      %cst_52 = arith.constant 1.000000e+00 : f32
      %85 = vector.broadcast %cst_52 : f32 to vector<8x64xf32>
      %86 = arith.addf %85, %84 : vector<8x64xf32>
      %87 = tpu.reciprocal %86 {approx = true} : vector<8x64xf32> -> vector<8x64xf32>
      %88 = vector.extract_strided_slice %73 {offsets = [0, 128], sizes = [8, 64], strides = [1, 1]} : vector<8x256xf32> to vector<8x64xf32>
      %89 = math.tanh %88 : vector<8x64xf32>
      %90 = vector.extract_strided_slice %73 {offsets = [0, 192], sizes = [8, 64], strides = [1, 1]} : vector<8x256xf32> to vector<8x64xf32>
      %cst_53 = arith.constant 0.000000e+00 : f32
      %91 = vector.broadcast %cst_53 : f32 to vector<8x64xf32>
      %92 = arith.subf %91, %90 : vector<8x64xf32>
      %93 = math.exp %92 : vector<8x64xf32>
      %cst_54 = arith.constant 1.000000e+00 : f32
      %94 = vector.broadcast %cst_54 : f32 to vector<8x64xf32>
      %95 = arith.addf %94, %93 : vector<8x64xf32>
      %96 = tpu.reciprocal %95 {approx = true} : vector<8x64xf32> -> vector<8x64xf32>
      %97 = arith.mulf %87, %66 : vector<8x64xf32>
      %98 = arith.mulf %80, %89 : vector<8x64xf32>
      %99 = arith.addf %97, %98 : vector<8x64xf32>
      %100 = math.tanh %99 : vector<8x64xf32>
      %101 = arith.mulf %96, %100 : vector<8x64xf32>
      %c1_55 = arith.constant 1 : index
      %c0_56 = arith.constant 0 : index
      %c0_57 = arith.constant 0 : index
      %102 = vector.load %arg13[%c1_55, %c0_56, %c0_57] : memref<2x8x64xf32, #tpu.memory_space<vmem>>, vector<1x8x64xf32>
      %103 = vector.shape_cast %102 : vector<1x8x64xf32> to vector<8x64xf32>
      %104 = vector.shape_cast %101 : vector<8x64xf32> to vector<1x8x64xf32>
      tpu.vector_store %arg13[%c1_55, %c0_56, %c0_57], %104 {strides = array<i32>} : memref<2x8x64xf32, #tpu.memory_space<vmem>>, vector<1x8x64xf32>,
      %c1_58 = arith.constant 1 : index
      %c0_59 = arith.constant 0 : index
      %c0_60 = arith.constant 0 : index
      %105 = vector.load %arg14[%c1_58, %c0_59, %c0_60] : memref<2x8x64xf32, #tpu.memory_space<vmem>>, vector<1x8x64xf32>
      %106 = vector.shape_cast %105 : vector<1x8x64xf32> to vector<8x64xf32>
      %107 = vector.shape_cast %99 : vector<8x64xf32> to vector<1x8x64xf32>
      tpu.vector_store %arg14[%c1_58, %c0_59, %c0_60], %107 {strides = array<i32>} : memref<2x8x64xf32, #tpu.memory_space<vmem>>, vector<1x8x64xf32>,
      %c0_61 = arith.constant 0 : index
      %c0_62 = arith.constant 0 : index
      %108 = vector.load %arg15[%c0_61, %c0_62] : memref<8x64xf32, #tpu.memory_space<vmem>>, vector<8x64xf32>
      tpu.vector_store %arg15[%c0_61, %c0_62], %101 {strides = array<i32>} : memref<8x64xf32, #tpu.memory_space<vmem>>, vector<8x64xf32>,
    } else {
    }
    %c0 = arith.constant 0 : index
    %c0_1 = arith.constant 0 : index
    %3 = vector.load %arg15[%c0, %c0_1] : memref<8x64xf32, #tpu.memory_space<vmem>>, vector<8x64xf32>
    %4 = arith.truncf %3 : vector<8x64xf32> to vector<8x64xbf16>
    %c0_2 = arith.constant 0 : index
    %c0_3 = arith.constant 0 : index
    %5 = vector.load %arg10[%c0_2, %c0_3] : memref<64x128xbf16, #tpu.memory_space<vmem>>, vector<64x128xbf16>
    %cst = arith.constant dense<0.000000e+00> : vector<8x128xf32>
    %6 = tpu.matmul %4, %5, %cst {dimension_numbers = #tpu.dot_dimension_numbers<[1], [0], [0], [1], [0, 0, 1, 1], [], []>} : vector<8x64xbf16>, vector<64x128xbf16>, vector<8x128xf32> -> vector<8x128xf32>
    %c0_4 = arith.constant 0 : index
    %c0_5 = arith.constant 0 : index
    %7 = vector.load %arg11[%c0_4, %c0_5] : memref<1x128xf32, #tpu.memory_space<vmem>>, vector<1x128xf32>
    %8 = vector.broadcast %7 : vector<1x128xf32> to vector<8x128xf32>
    %9 = arith.addf %6, %8 : vector<8x128xf32>
    %c0_6 = arith.constant 0 : index
    %c0_7 = arith.constant 0 : index
    %10 = vector.load %arg12[%c0_6, %c0_7] : memref<8x128xf32, #tpu.memory_space<vmem>>, vector<8x128xf32>
    tpu.vector_store %arg12[%c0_6, %c0_7], %9 {strides = array<i32>} : memref<8x128xf32, #tpu.memory_space<vmem>>, vector<8x128xf32>,
    return
  }
  func.func @transform_0(%arg0: i32) -> (i32, i32) {
    %c0_i32 = arith.constant 0 : i32
    %c0_i32_0 = arith.constant 0 : i32
    %c0_i32_1 = arith.constant 0 : i32
    return %c0_i32, %c0_i32_0 : i32, i32
  }
  func.func @transform_1(%arg0: i32) -> (i32, i32, i32) {
    %c0_i32 = arith.constant 0 : i32
    %c0_i32_0 = arith.constant 0 : i32
    %c0_i32_1 = arith.constant 0 : i32
    %c0_i32_2 = arith.constant 0 : i32
    return %c0_i32, %c0_i32_0, %c0_i32_1 : i32, i32, i32
  }
  func.func @transform_2(%arg0: i32) -> (i32, i32, i32) {
    %c0_i32 = arith.constant 0 : i32
    %c0_i32_0 = arith.constant 0 : i32
    %c0_i32_1 = arith.constant 0 : i32
    %c0_i32_2 = arith.constant 0 : i32
    return %c0_i32, %c0_i32_0, %c0_i32_1 : i32, i32, i32
  }
  func.func @transform_3(%arg0: i32) -> (i32, i32) {
    %c0_i32 = arith.constant 0 : i32
    %c0_i32_0 = arith.constant 0 : i32
    %c0_i32_1 = arith.constant 0 : i32
    return %c0_i32, %c0_i32_0 : i32, i32
  }
  func.func @transform_4(%arg0: i32) -> (i32, i32) {
    %c0_i32 = arith.constant 0 : i32
    %c0_i32_0 = arith.constant 0 : i32
    %c0_i32_1 = arith.constant 0 : i32
    return %c0_i32, %c0_i32_0 : i32, i32
  }
  func.func @transform_5(%arg0: i32) -> (i32, i32) {
    %c0_i32 = arith.constant 0 : i32
    %c0_i32_0 = arith.constant 0 : i32
    %c0_i32_1 = arith.constant 0 : i32
    return %c0_i32, %c0_i32_0 : i32, i32
  }
  func.func @transform_6(%arg0: i32) -> (i32, i32) {
    %c0_i32 = arith.constant 0 : i32
    %c0_i32_0 = arith.constant 0 : i32
    %c0_i32_1 = arith.constant 0 : i32
    return %c0_i32, %c0_i32_0 : i32, i32
  }
  func.func @transform_7(%arg0: i32) -> (i32, i32) {
    %c0_i32 = arith.constant 0 : i32
    %c0_i32_0 = arith.constant 0 : i32
    %c0_i32_1 = arith.constant 0 : i32
    return %c0_i32, %c0_i32_0 : i32, i32
  }
  func.func @transform_8(%arg0: i32) -> (i32, i32) {
    %c0_i32 = arith.constant 0 : i32
    %c0_i32_0 = arith.constant 0 : i32
    %c0_i32_1 = arith.constant 0 : i32
    return %c0_i32, %c0_i32_0 : i32, i32
  }
  func.func @transform_9(%arg0: i32) -> (i32, i32) {
    %c0_i32 = arith.constant 0 : i32
    %c0_i32_0 = arith.constant 0 : i32
    return %c0_i32, %arg0 : i32, i32
  }
  func.func @transform_10(%arg0: i32) -> (i32, i32) {
    %c0_i32 = arith.constant 0 : i32
    %c0_i32_0 = arith.constant 0 : i32
    return %c0_i32, %arg0 : i32, i32
  }
  func.func @transform_11(%arg0: i32) -> (i32, i32) {
    %c0_i32 = arith.constant 0 : i32
    %c0_i32_0 = arith.constant 0 : i32
    return %c0_i32, %arg0 : i32, i32
  }
  func.func @transform_12(%arg0: i32) -> (i32, i32, i32) {
    %c0_i32 = arith.constant 0 : i32
    %c0_i32_0 = arith.constant 0 : i32
    %c0_i32_1 = arith.constant 0 : i32
    %c0_i32_2 = arith.constant 0 : i32
    return %c0_i32, %c0_i32_0, %c0_i32_1 : i32, i32, i32
  }
  func.func @transform_13(%arg0: i32) -> (i32, i32, i32) {
    %c0_i32 = arith.constant 0 : i32
    %c0_i32_0 = arith.constant 0 : i32
    %c0_i32_1 = arith.constant 0 : i32
    %c0_i32_2 = arith.constant 0 : i32
    return %c0_i32, %c0_i32_0, %c0_i32_1 : i32, i32, i32
  }
}

</mosaic_0001>

<llo_original>
// kernel: tpu_custom_call.1
$region0: #{tpu_custom_call.1}
  #allocation0 [shape = 'u32[]', space=smem, size = 0x4, offset = 0x4, fixed_abs, tag = 'smem constant byte address 0x4 - core index']
  #allocation1 [shape = 'u32[144,128]{1,0:T(1,128)}', space=vmem, size = 0x12000, scoped, tag = 'internal scratch']
  #allocation2 [shape = 'f32[8,64]{1,0:T(8,128)}', space=vmem, size = 0x1000, scoped, tag = 'scratch operand']
  %s0 = inlined_call_operand.hbm [shape: f32[8,32], index: 0, kind: input, shape index: {}]
  %s1 = inlined_call_operand.hbm [shape: f32[2,8,64], index: 1, kind: input, shape index: {}]
  %s2 = inlined_call_operand.hbm [shape: f32[2,8,64], index: 2, kind: input, shape index: {}]
  %s3 = inlined_call_operand.hbm [shape: bf16[32,256], index: 3, kind: input, shape index: {}]
  %s4 = inlined_call_operand.hbm [shape: bf16[64,256], index: 4, kind: input, shape index: {}]
  %s5 = inlined_call_operand.vmem [shape: f32[1,256], index: 5, kind: input, shape index: {}]
  %s6 = inlined_call_operand.hbm [shape: bf16[64,256], index: 6, kind: input, shape index: {}]
  %s7 = inlined_call_operand.hbm [shape: bf16[64,256], index: 7, kind: input, shape index: {}]
  %s8 = inlined_call_operand.vmem [shape: f32[1,256], index: 8, kind: input, shape index: {}]
  %s9 = inlined_call_operand.hbm [shape: bf16[64,256], index: 9, kind: input, shape index: {}]
  %s10 = inlined_call_operand.vmem [shape: f32[1,256], index: 10, kind: input, shape index: {}]
  %s11 = inlined_call_operand.hbm [shape: f32[8,256], index: 11, kind: output, shape index: {0}]
  %s12 = inlined_call_operand.hbm [shape: f32[2,8,64], index: 12, kind: output, shape index: {1}]
  %s13 = inlined_call_operand.hbm [shape: f32[2,8,64], index: 13, kind: output, shape index: {2}]
  %14 = xla_tuple %s11, %s12, %s13
  %s15 = sld [smem:[#allocation0]]
  $region129: #{tpu_custom_call.1} parent=0
    _
  %s17 = ssub.s32 1, %s15
  %s18 = scalar_select 0, %s17, %s15
  $region1: #{tpu_custom_call.1} parent=0
    #allocation3 [shape = 'u8[4096]{0}', space=vmem, size = 0x1000, scoped, tag = 'input window, operand 0, single buffered']
    #allocation4 [shape = 's32[2]{0}', space=sflag, size = 0x8, scoped, tag = 'scoped memory for tpu_custom_call.1']
    #allocation5 [shape = 's32[2]{0}', space=sflag, size = 0x8, scoped, tag = 'scoped memory for tpu_custom_call.1']
    #allocation6 [shape = 'u8[8192]{0}', space=vmem, size = 0x2000, scoped, tag = 'input window, operand 1, single buffered']
    #allocation7 [shape = 's32[1]{0}', space=sflag, size = 0x4, scoped, tag = 'scoped memory for tpu_custom_call.1']
    #allocation8 [shape = 'u8[8192]{0}', space=vmem, size = 0x2000, scoped, tag = 'input window, operand 2, single buffered']
    #allocation9 [shape = 'u8[16384]{0}', space=vmem, size = 0x4000, scoped, tag = 'input window, operand 3, single buffered']
    #allocation10 [shape = 's32[1]{0}', space=sflag, size = 0x4, scoped, tag = 'scoped memory for tpu_custom_call.1']
    #allocation11 [shape = 'u8[32768]{0}', space=vmem, size = 0x8000, scoped, tag = 'input window, operand 4, single buffered']
    #allocation12 [shape = 'u8[32768]{0}', space=vmem, size = 0x8000, scoped, tag = 'input window, operand 6, single buffered']
    #allocation13 [shape = 's32[1]{0}', space=sflag, size = 0x4, scoped, tag = 'scoped memory for tpu_custom_call.1']
    #allocation14 [shape = 'u8[32768]{0}', space=vmem, size = 0x8000, scoped, tag = 'input window, operand 7, single buffered']
    #allocation15 [shape = 'u8[32768]{0}', space=vmem, size = 0x8000, scoped, tag = 'input window, operand 9']
    #allocation16 [shape = 's32[2]{0}', space=sflag, size = 0x8, scoped, tag = 'scoped memory for tpu_custom_call.1']
    #allocation17 [shape = 'u8[8192]{0}', space=vmem, size = 0x2000, scoped, tag = 'output window, operand 0']
    #allocation18 [shape = 'u8[8192]{0}', space=vmem, size = 0x2000, scoped, tag = 'output window, operand 1, single buffered']
    #allocation19 [shape = 's32[1]{0}', space=sflag, size = 0x4, scoped, tag = 'scoped memory for tpu_custom_call.1']
    #allocation20 [shape = 'u8[8192]{0}', space=vmem, size = 0x2000, scoped, tag = 'output window, operand 2, single buffered']
    %19 = vsyncpa [#allocation4], 0
    %20 = vsyncpa [#allocation7], 0
    %21 = vsyncpa [#allocation10], 0
    %22 = vsyncpa [#allocation13], 0
    %23 = vsyncpa [#allocation16], 0
    %s24 = scalar_lea.sflag [#allocation16], 1
    %25 = vsyncpa %s24, 0
    %26 = vsyncpa [#allocation5], 0
    %s27 = scalar_lea.sflag [#allocation5], 1
    %28 = vsyncpa %s27, 0
    %29 = vsyncpa [#allocation19], 0
    loop: start=0, step=1, limit=4
    $region2: #{tpu_custom_call.1} parent=1 // loop_pre_header
      _
    $region3: #{tpu_custom_call.1} parent=1 // loop_header
      %s31 = sphi 0, %s35
      %p32 = scmp.ge.s32.totalorder %s31, 4
      %s39 = sphi 0, %s39
      %s41 = sphi 0, %s39
      %s42 = sphi 0, %s41
      %s56 = sphi 0, %s42
      %s60 = sphi 0, %s60
      %s62 = sphi 0, %s60
      %s63 = sphi 0, %s62
      %s77 = sphi 0, %s63
      %s81 = sphi 0, %s81
      %s83 = sphi 0, %s81
      %s84 = sphi 0, %s83
      %s98 = sphi 0, %s84
      %s102 = sphi 0, %s102
      %s104 = sphi 0, %s102
      %s105 = sphi 0, %s104
      %s119 = sphi 0, %s105
      %s123 = sphi 0, %s123
      %s125 = sphi 0, %s123
      %s126 = sphi 0, %s125
      %s140 = sphi 0, %s126
      %s144 = sphi 0, %s144
      %s146 = sphi 0, %s144
      %s147 = sphi 0, %s146
      %s161 = sphi 0, %s147
      %s165 = sphi 0, %s165
      %s167 = sphi 0, %s165
      %s168 = sphi 0, %s167
      %s182 = sphi 0, %s168
      %s186 = sphi 0, %s186
      %s188 = sphi 0, %s186
      %s189 = sphi 0, %s188
      %s203 = sphi 0, %s189
      %s207 = sphi 0, %s207
      %s209 = sphi 0, %s207
      %s210 = sphi 0, %s209
      %s224 = sphi 0, %s210
      %s230 = sphi 0, %s232
      %s233 = sphi 0, %s230
      %s234 = sphi 0, %s233
      %s250 = sphi 0, %s234
      %s256 = sphi 0, %s258
      %s259 = sphi 0, %s256
      %s260 = sphi 0, %s259
      %s276 = sphi 0, %s260
      %s282 = sphi 0, %s284
      %s285 = sphi 0, %s282
      %s286 = sphi 0, %s285
      %s302 = sphi 0, %s286
      %s306 = sphi 0, %s306
      %s308 = sphi 0, %s306
      %s309 = sphi 0, %s308
      %s323 = sphi 0, %s309
      %s327 = sphi 0, %s327
      %s329 = sphi 0, %s327
      %s330 = sphi 0, %s329
      %s344 = sphi 0, %s330
    $region4: #{tpu_custom_call.1} parent=1 // loop_header_branch
      %34 = sbr.rel (%p32) target = $region8
    $region5: #{tpu_custom_call.1} parent=1 // loop_body
      %s36 = ssub.s32 %s31, 1
      %s37 = ssub.s32 %s31, 2
      %s38 = sadd.s32 %s31, 1
      %s40 = sadd.s32 %s39, 1
      %p43 = scmp.eq.s32.totalorder %s31, 1
      %p44 = scmp.ne.s32.totalorder %s39, %s41
      %p45 = scmp.eq.s32.totalorder %s31, 0
      %p46 = por %p44, %p45
      %p47 = scmp.ne.s32.totalorder %s39, %s41
      %p48 = scmp.eq.s32.totalorder %s36, 1
      %p49 = por %p47, %p48
      %p50 = scmp.ne.s32.totalorder %s41, %s42
      %p51 = scmp.eq.s32.totalorder %s36, 0
      %p52 = por %p50, %p51
      %p53 = scmp.ne.s32.totalorder %s41, %s42
      %p54 = scmp.eq.s32.totalorder %s37, 1
      %p55 = por %p53, %p54
      %p57 = scmp.ne.s32.totalorder %s42, %s56
      %p58 = scmp.eq.s32.totalorder %s37, 0
      %p59 = por %p57, %p58
      %s61 = sadd.s32 %s60, 1
      %p64 = scmp.eq.s32.totalorder %s31, 1
      %p65 = scmp.ne.s32.totalorder %s60, %s62
      %p66 = scmp.eq.s32.totalorder %s31, 0
      %p67 = por %p65, %p66
      %p68 = scmp.ne.s32.totalorder %s60, %s62
      %p69 = scmp.eq.s32.totalorder %s36, 1
      %p70 = por %p68, %p69
      %p71 = scmp.ne.s32.totalorder %s62, %s63
      %p72 = scmp.eq.s32.totalorder %s36, 0
      %p73 = por %p71, %p72
      %p74 = scmp.ne.s32.totalorder %s62, %s63
      %p75 = scmp.eq.s32.totalorder %s37, 1
      %p76 = por %p74, %p75
      %p78 = scmp.ne.s32.totalorder %s63, %s77
      %p79 = scmp.eq.s32.totalorder %s37, 0
      %p80 = por %p78, %p79
      %s82 = sadd.s32 %s81, 1
      %p85 = scmp.eq.s32.totalorder %s31, 1
      %p86 = scmp.ne.s32.totalorder %s81, %s83
      %p87 = scmp.eq.s32.totalorder %s31, 0
      %p88 = por %p86, %p87
      %p89 = scmp.ne.s32.totalorder %s81, %s83
      %p90 = scmp.eq.s32.totalorder %s36, 1
      %p91 = por %p89, %p90
      %p92 = scmp.ne.s32.totalorder %s83, %s84
      %p93 = scmp.eq.s32.totalorder %s36, 0
      %p94 = por %p92, %p93
      %p95 = scmp.ne.s32.totalorder %s83, %s84
      %p96 = scmp.eq.s32.totalorder %s37, 1
      %p97 = por %p95, %p96
      %p99 = scmp.ne.s32.totalorder %s84, %s98
      %p100 = scmp.eq.s32.totalorder %s37, 0
      %p101 = por %p99, %p100
      %s103 = sadd.s32 %s102, 1
      %p106 = scmp.eq.s32.totalorder %s31, 1
      %p107 = scmp.ne.s32.totalorder %s102, %s104
      %p108 = scmp.eq.s32.totalorder %s31, 0
      %p109 = por %p107, %p108
      %p110 = scmp.ne.s32.totalorder %s102, %s104
      %p111 = scmp.eq.s32.totalorder %s36, 1
      %p112 = por %p110, %p111
      %p113 = scmp.ne.s32.totalorder %s104, %s105
      %p114 = scmp.eq.s32.totalorder %s36, 0
      %p115 = por %p113, %p114
      %p116 = scmp.ne.s32.totalorder %s104, %s105
      %p117 = scmp.eq.s32.totalorder %s37, 1
      %p118 = por %p116, %p117
      %p120 = scmp.ne.s32.totalorder %s105, %s119
      %p121 = scmp.eq.s32.totalorder %s37, 0
      %p122 = por %p120, %p121
      %s124 = sadd.s32 %s123, 1
      %p127 = scmp.eq.s32.totalorder %s31, 1
      %p128 = scmp.ne.s32.totalorder %s123, %s125
      %p129 = scmp.eq.s32.totalorder %s31, 0
      %p130 = por %p128, %p129
      %p131 = scmp.ne.s32.totalorder %s123, %s125
      %p132 = scmp.eq.s32.totalorder %s36, 1
      %p133 = por %p131, %p132
      %p134 = scmp.ne.s32.totalorder %s125, %s126
      %p135 = scmp.eq.s32.totalorder %s36, 0
      %p136 = por %p134, %p135
      %p137 = scmp.ne.s32.totalorder %s125, %s126
      %p138 = scmp.eq.s32.totalorder %s37, 1
      %p139 = por %p137, %p138
      %p141 = scmp.ne.s32.totalorder %s126, %s140
      %p142 = scmp.eq.s32.totalorder %s37, 0
      %p143 = por %p141, %p142
      %s145 = sadd.s32 %s144, 1
      %p148 = scmp.eq.s32.totalorder %s31, 1
      %p149 = scmp.ne.s32.totalorder %s144, %s146
      %p150 = scmp.eq.s32.totalorder %s31, 0
      %p151 = por %p149, %p150
      %p152 = scmp.ne.s32.totalorder %s144, %s146
      %p153 = scmp.eq.s32.totalorder %s36, 1
      %p154 = por %p152, %p153
      %p155 = scmp.ne.s32.totalorder %s146, %s147
      %p156 = scmp.eq.s32.totalorder %s36, 0
      %p157 = por %p155, %p156
      %p158 = scmp.ne.s32.totalorder %s146, %s147
      %p159 = scmp.eq.s32.totalorder %s37, 1
      %p160 = por %p158, %p159
      %p162 = scmp.ne.s32.totalorder %s147, %s161
      %p163 = scmp.eq.s32.totalorder %s37, 0
      %p164 = por %p162, %p163
      %s166 = sadd.s32 %s165, 1
      %p169 = scmp.eq.s32.totalorder %s31, 1
      %p170 = scmp.ne.s32.totalorder %s165, %s167
      %p171 = scmp.eq.s32.totalorder %s31, 0
      %p172 = por %p170, %p171
      %p173 = scmp.ne.s32.totalorder %s165, %s167
      %p174 = scmp.eq.s32.totalorder %s36, 1
      %p175 = por %p173, %p174
      %p176 = scmp.ne.s32.totalorder %s167, %s168
      %p177 = scmp.eq.s32.totalorder %s36, 0
      %p178 = por %p176, %p177
      %p179 = scmp.ne.s32.totalorder %s167, %s168
      %p180 = scmp.eq.s32.totalorder %s37, 1
      %p181 = por %p179, %p180
      %p183 = scmp.ne.s32.totalorder %s168, %s182
      %p184 = scmp.eq.s32.totalorder %s37, 0
      %p185 = por %p183, %p184
      %s187 = sadd.s32 %s186, 1
      %p190 = scmp.eq.s32.totalorder %s31, 1
      %p191 = scmp.ne.s32.totalorder %s186, %s188
      %p192 = scmp.eq.s32.totalorder %s31, 0
      %p193 = por %p191, %p192
      %p194 = scmp.ne.s32.totalorder %s186, %s188
      %p195 = scmp.eq.s32.totalorder %s36, 1
      %p196 = por %p194, %p195
      %p197 = scmp.ne.s32.totalorder %s188, %s189
      %p198 = scmp.eq.s32.totalorder %s36, 0
      %p199 = por %p197, %p198
      %p200 = scmp.ne.s32.totalorder %s188, %s189
      %p201 = scmp.eq.s32.totalorder %s37, 1
      %p202 = por %p200, %p201
      %p204 = scmp.ne.s32.totalorder %s189, %s203
      %p205 = scmp.eq.s32.totalorder %s37, 0
      %p206 = por %p204, %p205
      %s208 = sadd.s32 %s207, 1
      %p211 = scmp.eq.s32.totalorder %s31, 1
      %p212 = scmp.ne.s32.totalorder %s207, %s209
      %p213 = scmp.eq.s32.totalorder %s31, 0
      %p214 = por %p212, %p213
      %p215 = scmp.ne.s32.totalorder %s207, %s209
      %p216 = scmp.eq.s32.totalorder %s36, 1
      %p217 = por %p215, %p216
      %p218 = scmp.ne.s32.totalorder %s209, %s210
      %p219 = scmp.eq.s32.totalorder %s36, 0
      %p220 = por %p218, %p219
      %p221 = scmp.ne.s32.totalorder %s209, %s210
      %p222 = scmp.eq.s32.totalorder %s37, 1
      %p223 = por %p221, %p222
      %p225 = scmp.ne.s32.totalorder %s210, %s224
      %p226 = scmp.eq.s32.totalorder %s37, 0
      %p227 = por %p225, %p226
      %s228 = ssub.s32 %s31, %s38
      %p229 = scmp.eq.s32.totalorder %s228, 0
      %s231 = sadd.s32 %s230, 1
      %s232 = scalar_select %p229, %s230, %s231
      %p235 = pneg %p229
      %p236 = scmp.eq.s32.totalorder %s31, 1
      %p237 = por %p235, %p236
      %p238 = scmp.ne.s32.totalorder %s230, %s233
      %p239 = scmp.eq.s32.totalorder %s31, 0
      %p240 = por %p238, %p239
      %p241 = scmp.ne.s32.totalorder %s230, %s233
      %p242 = scmp.eq.s32.totalorder %s36, 1
      %p243 = por %p241, %p242
      %p244 = scmp.ne.s32.totalorder %s233, %s234
      %p245 = scmp.eq.s32.totalorder %s36, 0
      %p246 = por %p244, %p245
      %p247 = scmp.ne.s32.totalorder %s233, %s234
      %p248 = scmp.eq.s32.totalorder %s37, 1
      %p249 = por %p247, %p248
      %p251 = scmp.ne.s32.totalorder %s234, %s250
      %p252 = scmp.eq.s32.totalorder %s37, 0
      %p253 = por %p251, %p252
      %s254 = ssub.s32 %s31, %s38
      %p255 = scmp.eq.s32.totalorder %s254, 0
      %s257 = sadd.s32 %s256, 1
      %s258 = scalar_select %p255, %s256, %s257
      %p261 = pneg %p255
      %p262 = scmp.eq.s32.totalorder %s31, 1
      %p263 = por %p261, %p262
      %p264 = scmp.ne.s32.totalorder %s256, %s259
      %p265 = scmp.eq.s32.totalorder %s31, 0
      %p266 = por %p264, %p265
      %p267 = scmp.ne.s32.totalorder %s256, %s259
      %p268 = scmp.eq.s32.totalorder %s36, 1
      %p269 = por %p267, %p268
      %p270 = scmp.ne.s32.totalorder %s259, %s260
      %p271 = scmp.eq.s32.totalorder %s36, 0
      %p272 = por %p270, %p271
      %p273 = scmp.ne.s32.totalorder %s259, %s260
      %p274 = scmp.eq.s32.totalorder %s37, 1
      %p275 = por %p273, %p274
      %p277 = scmp.ne.s32.totalorder %s260, %s276
      %p278 = scmp.eq.s32.totalorder %s37, 0
      %p279 = por %p277, %p278
      %s280 = ssub.s32 %s31, %s38
      %p281 = scmp.eq.s32.totalorder %s280, 0
      %s283 = sadd.s32 %s282, 1
      %s284 = scalar_select %p281, %s282, %s283
      %p287 = pneg %p281
      %p288 = scmp.eq.s32.totalorder %s31, 1
      %p289 = por %p287, %p288
      %p290 = scmp.ne.s32.totalorder %s282, %s285
      %p291 = scmp.eq.s32.totalorder %s31, 0
      %p292 = por %p290, %p291
      %p293 = scmp.ne.s32.totalorder %s282, %s285
      %p294 = scmp.eq.s32.totalorder %s36, 1
      %p295 = por %p293, %p294
      %p296 = scmp.ne.s32.totalorder %s285, %s286
      %p297 = scmp.eq.s32.totalorder %s36, 0
      %p298 = por %p296, %p297
      %p299 = scmp.ne.s32.totalorder %s285, %s286
      %p300 = scmp.eq.s32.totalorder %s37, 1
      %p301 = por %p299, %p300
      %p303 = scmp.ne.s32.totalorder %s286, %s302
      %p304 = scmp.eq.s32.totalorder %s37, 0
      %p305 = por %p303, %p304
      %s307 = sadd.s32 %s306, 1
      %p310 = scmp.eq.s32.totalorder %s31, 1
      %p311 = scmp.ne.s32.totalorder %s306, %s308
      %p312 = scmp.eq.s32.totalorder %s31, 0
      %p313 = por %p311, %p312
      %p314 = scmp.ne.s32.totalorder %s306, %s308
      %p315 = scmp.eq.s32.totalorder %s36, 1
      %p316 = por %p314, %p315
      %p317 = scmp.ne.s32.totalorder %s308, %s309
      %p318 = scmp.eq.s32.totalorder %s36, 0
      %p319 = por %p317, %p318
      %p320 = scmp.ne.s32.totalorder %s308, %s309
      %p321 = scmp.eq.s32.totalorder %s37, 1
      %p322 = por %p320, %p321
      %p324 = scmp.ne.s32.totalorder %s309, %s323
      %p325 = scmp.eq.s32.totalorder %s37, 0
      %p326 = por %p324, %p325
      %s328 = sadd.s32 %s327, 1
      %p331 = scmp.eq.s32.totalorder %s31, 1
      %p332 = scmp.ne.s32.totalorder %s327, %s329
      %p333 = scmp.eq.s32.totalorder %s31, 0
      %p334 = por %p332, %p333
      %p335 = scmp.ne.s32.totalorder %s327, %s329
      %p336 = scmp.eq.s32.totalorder %s36, 1
      %p337 = por %p335, %p336
      %p338 = scmp.ne.s32.totalorder %s329, %s330
      %p339 = scmp.eq.s32.totalorder %s36, 0
      %p340 = por %p338, %p339
      %p341 = scmp.ne.s32.totalorder %s329, %s330
      %p342 = scmp.eq.s32.totalorder %s37, 1
      %p343 = por %p341, %p342
      %p345 = scmp.ne.s32.totalorder %s330, %s344
      %p346 = scmp.eq.s32.totalorder %s37, 0
      %p347 = por %p345, %p346
      %p348 = scmp.le.s32.totalorder 1, %s31
      %p349 = scmp.lt.s32.totalorder %s31, 3
      %p350 = pnand %p348, %p349
      %p351 = pneg %p350
      // Predicated region
      $region9: #{tpu_custom_call.1} parent=5 // pred_check
        _
      $region10: #{tpu_custom_call.1} parent=5 // pred_check_branch
        %353 = sbr.rel (%p350) target = $region12
      $region11: #{tpu_custom_call.1} parent=5 // pred_region
        %s354 = ssub.s32 %s31, 1
        // Predicated region
        $region13: #{tpu_custom_call.1} parent=11 // pred_check
          %p355 = pneg %p52
        $region14: #{tpu_custom_call.1} parent=11 // pred_check_branch
          %357 = sbr.rel (%p355) target = $region16
        $region15: #{tpu_custom_call.1} parent=11 // pred_region
          %s359 = ssub.s32 128, 128
          %360 = vsyncadd [#allocation4], %s359
          %s362 = sshll.u32 [#allocation3], 4
          %s363 = int_to_ptr.vmem [resolvable:$true] %s362
          %365 = dma.hbm_to_vmem [thread:$0]  %s0, 128, %s363, [#allocation4]
        $region16: #{tpu_custom_call.1} parent=11 // pred_fallthru
          _
        // Predicated region
        $region17: #{tpu_custom_call.1} parent=11 // pred_check
          %p366 = pneg %p73
        $region18: #{tpu_custom_call.1} parent=11 // pred_check_branch
          %368 = sbr.rel (%p366) target = $region20
        $region19: #{tpu_custom_call.1} parent=11 // pred_region
          %s370 = ssub.s32 256, 256
          %371 = vsyncadd [#allocation7], %s370
          %s372 = sshll.u32 [#allocation6], 4
          %s373 = int_to_ptr.vmem [resolvable:$true] %s372
          %378 = dma.hbm_to_vmem [thread:$0]  %s1, 256, %s373, [#allocation7], 128, 128, 8
        $region20: #{tpu_custom_call.1} parent=11 // pred_fallthru
          _
        // Predicated region
        $region21: #{tpu_custom_call.1} parent=11 // pred_check
          %p379 = pneg %p94
        $region22: #{tpu_custom_call.1} parent=11 // pred_check_branch
          %381 = sbr.rel (%p379) target = $region24
        $region23: #{tpu_custom_call.1} parent=11 // pred_region
          %s383 = ssub.s32 256, 256
          %384 = vsyncadd [#allocation7], %s383
          %s385 = sshll.u32 [#allocation8], 4
          %s386 = int_to_ptr.vmem [resolvable:$true] %s385
          %391 = dma.hbm_to_vmem [thread:$0]  %s2, 256, %s386, [#allocation7], 128, 128, 8
        $region24: #{tpu_custom_call.1} parent=11 // pred_fallthru
          _
        // Predicated region
        $region25: #{tpu_custom_call.1} parent=11 // pred_check
          %p392 = pneg %p115
        $region26: #{tpu_custom_call.1} parent=11 // pred_check_branch
          %394 = sbr.rel (%p392) target = $region28
        $region27: #{tpu_custom_call.1} parent=11 // pred_region
          %s396 = ssub.s32 512, 512
          %397 = vsyncadd [#allocation10], %s396
          %s398 = sshll.u32 [#allocation9], 4
          %s399 = int_to_ptr.vmem [resolvable:$true] %s398
          %404 = dma.hbm_to_vmem [thread:$0]  %s3, 512, %s399, [#allocation10], 128, 128, 8
        $region28: #{tpu_custom_call.1} parent=11 // pred_fallthru
          _
        // Predicated region
        $region29: #{tpu_custom_call.1} parent=11 // pred_check
          %p405 = pneg %p136
        $region30: #{tpu_custom_call.1} parent=11 // pred_check_branch
          %407 = sbr.rel (%p405) target = $region32
        $region31: #{tpu_custom_call.1} parent=11 // pred_region
          %s409 = ssub.s32 1024, 1024
          %410 = vsyncadd [#allocation10], %s409
          %s411 = sshll.u32 [#allocation11], 4
          %s412 = int_to_ptr.vmem [resolvable:$true] %s411
          %417 = dma.hbm_to_vmem [thread:$0]  %s4, 1024, %s412, [#allocation10], 128, 128, 8
        $region32: #{tpu_custom_call.1} parent=11 // pred_fallthru
          _
        // Predicated region
        $region33: #{tpu_custom_call.1} parent=11 // pred_check
          %p418 = pneg %p157
        $region34: #{tpu_custom_call.1} parent=11 // pred_check_branch
          %420 = sbr.rel (%p418) target = $region36
        $region35: #{tpu_custom_call.1} parent=11 // pred_region
          _
        $region36: #{tpu_custom_call.1} parent=11 // pred_fallthru
          _
        // Predicated region
        $region37: #{tpu_custom_call.1} parent=11 // pred_check
          %p421 = pneg %p178
        $region38: #{tpu_custom_call.1} parent=11 // pred_check_branch
          %423 = sbr.rel (%p421) target = $region40
        $region39: #{tpu_custom_call.1} parent=11 // pred_region
          %s425 = ssub.s32 1024, 1024
          %426 = vsyncadd [#allocation13], %s425
          %s427 = sshll.u32 [#allocation12], 4
          %s428 = int_to_ptr.vmem [resolvable:$true] %s427
          %433 = dma.hbm_to_vmem [thread:$0]  %s6, 1024, %s428, [#allocation13], 128, 128, 8
        $region40: #{tpu_custom_call.1} parent=11 // pred_fallthru
          _
        // Predicated region
        $region41: #{tpu_custom_call.1} parent=11 // pred_check
          %p434 = pneg %p199
        $region42: #{tpu_custom_call.1} parent=11 // pred_check_branch
          %436 = sbr.rel (%p434) target = $region44
        $region43: #{tpu_custom_call.1} parent=11 // pred_region
          %s438 = ssub.s32 1024, 1024
          %439 = vsyncadd [#allocation13], %s438
          %s440 = sshll.u32 [#allocation14], 4
          %s441 = int_to_ptr.vmem [resolvable:$true] %s440
          %446 = dma.hbm_to_vmem [thread:$0]  %s7, 1024, %s441, [#allocation13], 128, 128, 8
        $region44: #{tpu_custom_call.1} parent=11 // pred_fallthru
          _
        // Predicated region
        $region45: #{tpu_custom_call.1} parent=11 // pred_check
          %p447 = pneg %p220
        $region46: #{tpu_custom_call.1} parent=11 // pred_check_branch
          %449 = sbr.rel (%p447) target = $region48
        $region47: #{tpu_custom_call.1} parent=11 // pred_region
          _
        $region48: #{tpu_custom_call.1} parent=11 // pred_fallthru
          _
      $region12: #{tpu_custom_call.1} parent=5 // pred_fallthru
        _
      %p450 = scmp.lt.s32.totalorder %s31, 2
      // Predicated region
      $region49: #{tpu_custom_call.1} parent=5 // pred_check
        %p451 = pneg %p450
      $region50: #{tpu_custom_call.1} parent=5 // pred_check_branch
        %453 = sbr.rel (%p451) target = $region52
      $region51: #{tpu_custom_call.1} parent=5 // pred_region
        // Predicated region
        $region53: #{tpu_custom_call.1} parent=51 // pred_check
          %p454 = pneg %p240
        $region54: #{tpu_custom_call.1} parent=51 // pred_check_branch
          %456 = sbr.rel (%p454) target = $region56
        $region55: #{tpu_custom_call.1} parent=51 // pred_region
          %s457 = sand.u32 %s230, 1
          %s458 = scalar_lea.sflag [#allocation16], %s457
          %s459 = sand.u32 %s230, 1
          %s460 = smul.addr %s459, 32
          %s461 = scalar_lea.vmem [#allocation15], %s460
          %s463 = ssub.s32 512, 512
          %464 = vsyncadd %s458, %s463
          %s465 = smul.addr %s31, 64
          %s466 = scalar_lea.hbm %s9, %s465
          %s467 = sshll.u32 %s461, 4
          %s468 = int_to_ptr.vmem [resolvable:$true] %s467
          %473 = dma.hbm_to_vmem [thread:$0]  %s466, 512, %s468, %s458, 128, 64, 4
        $region56: #{tpu_custom_call.1} parent=51 // pred_fallthru
          _
        // Predicated region
        $region57: #{tpu_custom_call.1} parent=51 // pred_check
          %p474 = pneg %p266
        $region58: #{tpu_custom_call.1} parent=51 // pred_check_branch
          %476 = sbr.rel (%p474) target = $region60
        $region59: #{tpu_custom_call.1} parent=51 // pred_region
          %p477 = scmp.lt.s32.totalorder %s31, 1
          %s478 = scalar_select %p477, %s31, 1
          %s479 = scalar_lea.vmem %s10, %s478
        $region60: #{tpu_custom_call.1} parent=51 // pred_fallthru
          _
      $region52: #{tpu_custom_call.1} parent=5 // pred_fallthru
        _
      %p480 = scmp.le.s32.totalorder 1, %s31
      %p481 = scmp.lt.s32.totalorder %s31, 3
      %p482 = pnand %p480, %p481
      %p483 = pneg %p482
      // Predicated region
      $region61: #{tpu_custom_call.1} parent=5 // pred_check
        _
      $region62: #{tpu_custom_call.1} parent=5 // pred_check_branch
        %485 = sbr.rel (%p482) target = $region64
      $region63: #{tpu_custom_call.1} parent=5 // pred_region
        %s486 = ssub.s32 %s31, 1
        // Predicated region
        $region65: #{tpu_custom_call.1} parent=63 // pred_check
          %p487 = pneg %p52
        $region66: #{tpu_custom_call.1} parent=63 // pred_check_branch
          %489 = sbr.rel (%p487) target = $region68
        $region67: #{tpu_custom_call.1} parent=63 // pred_region
          %490 = dma.done [#allocation4], 128
        $region68: #{tpu_custom_call.1} parent=63 // pred_fallthru
          _
        // Predicated region
        $region69: #{tpu_custom_call.1} parent=63 // pred_check
          %p491 = pneg %p73
        $region70: #{tpu_custom_call.1} parent=63 // pred_check_branch
          %493 = sbr.rel (%p491) target = $region72
        $region71: #{tpu_custom_call.1} parent=63 // pred_region
          %494 = dma.done [#allocation7], 256
        $region72: #{tpu_custom_call.1} parent=63 // pred_fallthru
          _
        // Predicated region
        $region73: #{tpu_custom_call.1} parent=63 // pred_check
          %p495 = pneg %p94
        $region74: #{tpu_custom_call.1} parent=63 // pred_check_branch
          %497 = sbr.rel (%p495) target = $region76
        $region75: #{tpu_custom_call.1} parent=63 // pred_region
          %498 = dma.done [#allocation7], 256
        $region76: #{tpu_custom_call.1} parent=63 // pred_fallthru
          _
        // Predicated region
        $region77: #{tpu_custom_call.1} parent=63 // pred_check
          %p499 = pneg %p115
        $region78: #{tpu_custom_call.1} parent=63 // pred_check_branch
          %501 = sbr.rel (%p499) target = $region80
        $region79: #{tpu_custom_call.1} parent=63 // pred_region
          %502 = dma.done [#allocation10], 512
        $region80: #{tpu_custom_call.1} parent=63 // pred_fallthru
          _
        // Predicated region
        $region81: #{tpu_custom_call.1} parent=63 // pred_check
          %p503 = pneg %p136
        $region82: #{tpu_custom_call.1} parent=63 // pred_check_branch
          %505 = sbr.rel (%p503) target = $region84
        $region83: #{tpu_custom_call.1} parent=63 // pred_region
          %506 = dma.done [#allocation10], 1024
        $region84: #{tpu_custom_call.1} parent=63 // pred_fallthru
          _
        // Predicated region
        $region85: #{tpu_custom_call.1} parent=63 // pred_check
          %p507 = pneg %p178
        $region86: #{tpu_custom_call.1} parent=63 // pred_check_branch
          %509 = sbr.rel (%p507) target = $region88
        $region87: #{tpu_custom_call.1} parent=63 // pred_region
          %510 = dma.done [#allocation13], 1024
        $region88: #{tpu_custom_call.1} parent=63 // pred_fallthru
          _
        // Predicated region
        $region89: #{tpu_custom_call.1} parent=63 // pred_check
          %p511 = pneg %p199
        $region90: #{tpu_custom_call.1} parent=63 // pred_check_branch
          %513 = sbr.rel (%p511) target = $region92
        $region91: #{tpu_custom_call.1} parent=63 // pred_region
          %514 = dma.done [#allocation13], 1024
        $region92: #{tpu_custom_call.1} parent=63 // pred_fallthru
          _
        %s515 = sand.u32 %s233, 1
        %s516 = scalar_lea.sflag [#allocation16], %s515
        %s517 = sand.u32 %s233, 1
        %s518 = smul.addr %s517, 32
        %s519 = scalar_lea.vmem [#allocation15], %s518
        // Predicated region
        $region93: #{tpu_custom_call.1} parent=63 // pred_check
          %p520 = pneg %p246
        $region94: #{tpu_custom_call.1} parent=63 // pred_check_branch
          %522 = sbr.rel (%p520) target = $region96
        $region95: #{tpu_custom_call.1} parent=63 // pred_region
          %523 = dma.done %s516, 512
        $region96: #{tpu_custom_call.1} parent=63 // pred_fallthru
          _
        %p524 = pneg %p52
        %p525 = pneg %p49
        %p526 = pneg %p73
        %p527 = pneg %p70
        %p528 = pneg %p94
        %p529 = pneg %p91
        %p530 = pneg %p115
        %p531 = pneg %p112
        %p532 = pneg %p136
        %p533 = pneg %p133
        %p534 = pneg %p157
        %p535 = pneg %p154
        %p536 = pneg %p178
        %p537 = pneg %p175
        %p538 = pneg %p199
        %p539 = pneg %p196
        %p540 = pneg %p220
        %p541 = pneg %p217
        %s542 = sand.u32 %s233, 1
        %s543 = scalar_lea.sflag [#allocation16], %s542
        %s544 = sand.u32 %s233, 1
        %s545 = smul.addr %s544, 32
        %s546 = scalar_lea.vmem [#allocation15], %s545
        %p547 = pneg %p246
        %p548 = pneg %p243
        %p549 = scmp.lt.s32.totalorder %s36, 1
        %s550 = scalar_select %p549, %s36, 1
        %s551 = scalar_lea.vmem %s10, %s550
        %p552 = pneg %p272
        %p553 = pneg %p269
        %p554 = pneg %p298
        %p555 = pneg %p295
        %s556 = sand.u32 %s285, 1
        %s557 = scalar_lea.sflag [#allocation5], %s556
        %s558 = sand.u32 %s285, 1
        %s559 = smul.addr %s558, 8
        %s560 = scalar_lea.vmem [#allocation17], %s559
        %p561 = pneg %p319
        %p562 = pneg %p316
        %p563 = pneg %p340
        %p564 = pneg %p337
        %p565 = scmp.lt.s32.totalorder %s36, 1
        %s566 = scalar_select %p565, %s36, 1
        %s567 = scalar_lea.vmem %s10, %s566
        %p569 = scmp.eq.s32.totalorder %s36, 0
        // Predicated region
        $region97: #{tpu_custom_call.1} parent=63 // pred_check
          %p570 = pneg %p569
        $region98: #{tpu_custom_call.1} parent=63 // pred_check_branch
          %572 = sbr.rel (%p570) target = $region100
        $region99: #{tpu_custom_call.1} parent=63 // pred_region
          %v573 = vld [vmem:[#allocation3] sm:$0xff]
          %v574 = vld [vmem:[#allocation9] sm:$0xff]
          %v575 = vld [vmem:[#allocation9 + $0x8] sm:$0xff]
          %v576 = vld [vmem:[#allocation9 + $0x10] sm:$0xff]
          %v577 = vld [vmem:[#allocation9 + $0x18] sm:$0xff]
          %v578 = vld [vmem:[#allocation11] sm:$0xff]
          %v579 = vld [vmem:[#allocation11 + $0x8] sm:$0xff]
          %v580 = vld [vmem:[#allocation11 + $0x10] sm:$0xff]
          %v581 = vld [vmem:[#allocation11 + $0x18] sm:$0xff]
          %v582 = vld [vmem:[#allocation11 + $0x20] sm:$0xff]
          %v583 = vld [vmem:[#allocation11 + $0x28] sm:$0xff]
          %v584 = vld [vmem:[#allocation11 + $0x30] sm:$0xff]
          %v585 = vld [vmem:[#allocation11 + $0x38] sm:$0xff]
          %v586 = vld [vmem:[%s5] sm:$0x3]
          %v587 = vld [vmem:[#allocation6] sm:$0xff]
          %v588 = vld [vmem:[#allocation8] sm:$0xff]
          %v589 = vpack.c.bf16 %v573, %v573
          %v590 = vpack.c.bf16 %v587, %v587
          %v599 = vunpack.c.l.b16 %v578
          %v600 = vunpack.c.h.b16 %v578
          %v601 = vunpack.c.l.b16 %v579
          %v602 = vunpack.c.h.b16 %v579
          %v603 = vunpack.c.l.b16 %v580
          %v604 = vunpack.c.h.b16 %v580
          %v605 = vunpack.c.l.b16 %v581
          %v606 = vunpack.c.h.b16 %v581
          %v607 = vunpack.c.l.b16 %v582
          %v608 = vunpack.c.h.b16 %v582
          %v609 = vunpack.c.l.b16 %v583
          %v610 = vunpack.c.h.b16 %v583
          %v611 = vunpack.c.l.b16 %v584
          %v612 = vunpack.c.h.b16 %v584
          %v613 = vunpack.c.l.b16 %v585
          %v614 = vunpack.c.h.b16 %v585
          %v615 = vpack.c.b16 %v601, %v599
          %v616 = vpack.c.b16 %v602, %v600
          %v617 = vpack.c.b16 %v605, %v603
          %v618 = vpack.c.b16 %v606, %v604
          %v619 = vpack.c.b16 %v609, %v607
          %v620 = vpack.c.b16 %v610, %v608
          %v621 = vpack.c.b16 %v613, %v611
          %v622 = vpack.c.b16 %v614, %v612
          %vm631 = vcmask 523264
          %v633 = vsel %vm631, %v590, 0
          %635 = vmatprep.subr.bf16.mxu0 0
          %636 = vmatpush1.bf16.msra.mxu0 0
          %637 = vmatprep.subr.bf16.mxu0 0
          %638 = vmatpush1.bf16.msra.mxu0 0
          %639 = vmatprep.subr.bf16.mxu0 0
          %640 = vmatpush1.bf16.msra.mxu0 0
          %641 = vmatprep.subr.bf16.mxu0 0
          %642 = vmatpush1.bf16.msra.mxu0 0
          %643 = vmatprep.subr.bf16.mxu0 %v622
          %644 = vmatpush1.bf16.msra.mxu0 %v621
          %645 = vmatprep.subr.bf16.mxu0 %v620
          %646 = vmatpush1.bf16.msra.mxu0 %v619
          %647 = vmatprep.subr.bf16.mxu0 %v618
          %648 = vmatpush1.bf16.msra.mxu0 %v617
          %649 = vmatprep.subr.bf16.mxu0 %v616
          %650 = vmatpush1.bf16.msra.mxu0 %v615
          %651 = vmatprep.subr.bf16.mxu0 0
          %652 = vmatpush2.bf16.msra.mxu0 0
          %653 = vmatprep.subr.bf16.mxu0 0
          %654 = vmatpush2.bf16.msra.mxu0 0
          %655 = vmatprep.subr.bf16.mxu0 0
          %656 = vmatpush2.bf16.msra.mxu0 0
          %657 = vmatprep.subr.bf16.mxu0 0
          %658 = vmatpush2.bf16.msra.mxu0 0
          %659 = vmatprep.subr.bf16.mxu0 0
          %660 = vmatpush2.bf16.msra.mxu0 0
          %661 = vmatprep.subr.bf16.mxu0 0
          %662 = vmatpush2.bf16.msra.mxu0 0
          %663 = vmatprep.subr.bf16.mxu0 0
          %664 = vmatpush2.bf16.msra.mxu0 0
          %665 = vmatprep.subr.bf16.mxu0 0
          %666 = vmatpush2.bf16.msra.mxu0 0
          %667 = vmatprep.mubr.bf16.mxu0 0
          %668 = vmatmul.mubr.bf16.gmra.mxu0 %v633
          %v669 = vpop.f32.mrf.mxu0
          %v670 = vadd.f32 0.0, %v669
          %v671 = vpop.f32.mrf.mxu0
          %v672 = vadd.f32 0.0, %v671
          %v673 = vpop.f32.mrf.mxu0
          %v674 = vpop.f32.mrf.mxu0
          %675 = vdwg.mxu0
          %v680 = vunpack.c.l.b16 %v574
          %v681 = vunpack.c.h.b16 %v574
          %v682 = vunpack.c.l.b16 %v575
          %v683 = vunpack.c.h.b16 %v575
          %v684 = vunpack.c.l.b16 %v576
          %v685 = vunpack.c.h.b16 %v576
          %v686 = vunpack.c.l.b16 %v577
          %v687 = vunpack.c.h.b16 %v577
          %v688 = vpack.c.b16 %v682, %v680
          %v689 = vpack.c.b16 %v683, %v681
          %v690 = vpack.c.b16 %v686, %v684
          %v691 = vpack.c.b16 %v687, %v685
          %vm696 = vcmask 261120
          %v698 = vsel %vm696, %v589, 0
          %700 = vmatprep.subr.bf16.mxu0 0
          %701 = vmatpush1.bf16.msra.mxu0 0
          %702 = vmatprep.subr.bf16.mxu0 0
          %703 = vmatpush1.bf16.msra.mxu0 0
          %704 = vmatprep.subr.bf16.mxu0 0
          %705 = vmatpush1.bf16.msra.mxu0 0
          %706 = vmatprep.subr.bf16.mxu0 0
          %707 = vmatpush1.bf16.msra.mxu0 0
          %708 = vmatprep.subr.bf16.mxu0 0
          %709 = vmatpush1.bf16.msra.mxu0 0
          %710 = vmatprep.subr.bf16.mxu0 0
          %711 = vmatpush1.bf16.msra.mxu0 0
          %712 = vmatprep.subr.bf16.mxu0 %v691
          %713 = vmatpush1.bf16.msra.mxu0 %v690
          %714 = vmatprep.subr.bf16.mxu0 %v689
          %715 = vmatpush1.bf16.msra.mxu0 %v688
          %716 = vmatprep.subr.bf16.mxu0 0
          %717 = vmatpush2.bf16.msra.mxu0 0
          %718 = vmatprep.subr.bf16.mxu0 0
          %719 = vmatpush2.bf16.msra.mxu0 0
          %720 = vmatprep.subr.bf16.mxu0 0
          %721 = vmatpush2.bf16.msra.mxu0 0
          %722 = vmatprep.subr.bf16.mxu0 0
          %723 = vmatpush2.bf16.msra.mxu0 0
          %724 = vmatprep.subr.bf16.mxu0 0
          %725 = vmatpush2.bf16.msra.mxu0 0
          %726 = vmatprep.subr.bf16.mxu0 0
          %727 = vmatpush2.bf16.msra.mxu0 0
          %728 = vmatprep.subr.bf16.mxu0 0
          %729 = vmatpush2.bf16.msra.mxu0 0
          %730 = vmatprep.subr.bf16.mxu0 0
          %731 = vmatpush2.bf16.msra.mxu0 0
          %732 = vmatprep.mubr.bf16.mxu0 0
          %733 = vmatmul.mubr.bf16.gmra.mxu0 %v698
          %v734 = vpop.f32.mrf.mxu0
          %v735 = vadd.f32 %v670, %v734
          %v736 = vpop.f32.mrf.mxu0
          %v737 = vadd.f32 %v672, %v736
          %v738 = vpop.f32.mrf.mxu0
          %v739 = vpop.f32.mrf.mxu0
          %740 = vdwg.mxu0
          %v742 = vlaneseq
          %v743 = vshrl.u32 %v742, 7
          %v744 = vsub.s32 0, %v743
          %v745 = vrot.slane %v586, %v744
          %v746 = vlaneseq
          %v747 = vshrl.u32 %v746, 7
          %v748 = vsub.s32 1, %v747
          %v749 = vrot.slane %v586, %v748
          %v752 = vadd.f32 %v735, %v745
          %v753 = vadd.f32 %v737, %v749
          %v754 = vsub.f32 0.0, %v752
          %v755 = vmul.f32 %v754, 1.442695
          %v756 = vpow.pop %v755
          %v757 = vadd.f32 %v756, 1.0
          %v758 = vrcp.pop %v757
          %v759 = vtanh.pop %v753
          %v760 = vsub.f32 0.0, %v753
          %v761 = vmul.f32 %v760, 1.442695
          %v762 = vpow.pop %v761
          %v763 = vadd.f32 %v762, 1.0
          %v764 = vrcp.pop %v763
          %766 = vrot.lane.b32.xlu0 %v588, 64
          %v767 = vpop.permute.xlu0 %766
          %v769 = vmul.f32 %v758, %v767
          %v770 = vmul.f32 %v758, %v759
          %772 = vrot.lane.b32.xlu0 %v770, 64
          %v773 = vpop.permute.xlu0 %772
          %v775 = vadd.f32 %v769, %v773
          %v776 = vtanh.pop %v775
          %v777 = vmul.f32 %v764, %v776
          %779 = vrot.lane.b32.xlu0 %v777, 64
          %v780 = vpop.permute.xlu0 %779
          %782 = vst.msk [vmem:[#allocation18] sm:$0xff] %vm631, %v780
          %784 = vrot.lane.b32.xlu0 %v775, 64
          %v785 = vpop.permute.xlu0 %784
          %787 = vst.msk [vmem:[#allocation20] sm:$0xff] %vm631, %v785
          %v788 = vld [vmem:[#allocation12] sm:$0xff]
          %v789 = vld [vmem:[#allocation12 + $0x8] sm:$0xff]
          %v790 = vld [vmem:[#allocation12 + $0x10] sm:$0xff]
          %v791 = vld [vmem:[#allocation12 + $0x18] sm:$0xff]
          %v792 = vld [vmem:[#allocation12 + $0x20] sm:$0xff]
          %v793 = vld [vmem:[#allocation12 + $0x28] sm:$0xff]
          %v794 = vld [vmem:[#allocation12 + $0x30] sm:$0xff]
          %v795 = vld [vmem:[#allocation12 + $0x38] sm:$0xff]
          %v796 = vld [vmem:[#allocation14] sm:$0xff]
          %v797 = vld [vmem:[#allocation14 + $0x8] sm:$0xff]
          %v798 = vld [vmem:[#allocation14 + $0x10] sm:$0xff]
          %v799 = vld [vmem:[#allocation14 + $0x18] sm:$0xff]
          %v800 = vld [vmem:[#allocation14 + $0x20] sm:$0xff]
          %v801 = vld [vmem:[#allocation14 + $0x28] sm:$0xff]
          %v802 = vld [vmem:[#allocation14 + $0x30] sm:$0xff]
          %v803 = vld [vmem:[#allocation14 + $0x38] sm:$0xff]
          %v804 = vld [vmem:[%s8] sm:$0x3]
          %s805 = scalar_lea.vmem [#allocation6], 8
          %v806 = vld [vmem:[%s805] sm:$0xff]
          %s807 = scalar_lea.vmem [#allocation8], 8
          %v808 = vld [vmem:[%s807] sm:$0xff]
          %v809 = vpack.c.bf16 %v777, %v777
          %v810 = vpack.c.bf16 %v806, %v806
          %v819 = vunpack.c.l.b16 %v796
          %v820 = vunpack.c.h.b16 %v796
          %v821 = vunpack.c.l.b16 %v797
          %v822 = vunpack.c.h.b16 %v797
          %v823 = vunpack.c.l.b16 %v798
          %v824 = vunpack.c.h.b16 %v798
          %v825 = vunpack.c.l.b16 %v799
          %v826 = vunpack.c.h.b16 %v799
          %v827 = vunpack.c.l.b16 %v800
          %v828 = vunpack.c.h.b16 %v800
          %v829 = vunpack.c.l.b16 %v801
          %v830 = vunpack.c.h.b16 %v801
          %v831 = vunpack.c.l.b16 %v802
          %v832 = vunpack.c.h.b16 %v802
          %v833 = vunpack.c.l.b16 %v803
          %v834 = vunpack.c.h.b16 %v803
          %v835 = vpack.c.b16 %v821, %v819
          %v836 = vpack.c.b16 %v822, %v820
          %v837 = vpack.c.b16 %v825, %v823
          %v838 = vpack.c.b16 %v826, %v824
          %v839 = vpack.c.b16 %v829, %v827
          %v840 = vpack.c.b16 %v830, %v828
          %v841 = vpack.c.b16 %v833, %v831
          %v842 = vpack.c.b16 %v834, %v832
          %v852 = vsel %vm631, %v810, 0
          %854 = vmatprep.subr.bf16.mxu0 0
          %855 = vmatpush1.bf16.msra.mxu0 0
          %856 = vmatprep.subr.bf16.mxu0 0
          %857 = vmatpush1.bf16.msra.mxu0 0
          %858 = vmatprep.subr.bf16.mxu0 0
          %859 = vmatpush1.bf16.msra.mxu0 0
          %860 = vmatprep.subr.bf16.mxu0 0
          %861 = vmatpush1.bf16.msra.mxu0 0
          %862 = vmatprep.subr.bf16.mxu0 %v842
          %863 = vmatpush1.bf16.msra.mxu0 %v841
          %864 = vmatprep.subr.bf16.mxu0 %v840
          %865 = vmatpush1.bf16.msra.mxu0 %v839
          %866 = vmatprep.subr.bf16.mxu0 %v838
          %867 = vmatpush1.bf16.msra.mxu0 %v837
          %868 = vmatprep.subr.bf16.mxu0 %v836
          %869 = vmatpush1.bf16.msra.mxu0 %v835
          %870 = vmatprep.subr.bf16.mxu0 0
          %871 = vmatpush2.bf16.msra.mxu0 0
          %872 = vmatprep.subr.bf16.mxu0 0
          %873 = vmatpush2.bf16.msra.mxu0 0
          %874 = vmatprep.subr.bf16.mxu0 0
          %875 = vmatpush2.bf16.msra.mxu0 0
          %876 = vmatprep.subr.bf16.mxu0 0
          %877 = vmatpush2.bf16.msra.mxu0 0
          %878 = vmatprep.subr.bf16.mxu0 0
          %879 = vmatpush2.bf16.msra.mxu0 0
          %880 = vmatprep.subr.bf16.mxu0 0
          %881 = vmatpush2.bf16.msra.mxu0 0
          %882 = vmatprep.subr.bf16.mxu0 0
          %883 = vmatpush2.bf16.msra.mxu0 0
          %884 = vmatprep.subr.bf16.mxu0 0
          %885 = vmatpush2.bf16.msra.mxu0 0
          %886 = vmatprep.mubr.bf16.mxu0 0
          %887 = vmatmul.mubr.bf16.gmra.mxu0 %v852
          %v888 = vpop.f32.mrf.mxu0
          %v889 = vadd.f32 0.0, %v888
          %v890 = vpop.f32.mrf.mxu0
          %v891 = vadd.f32 0.0, %v890
          %v892 = vpop.f32.mrf.mxu0
          %v893 = vpop.f32.mrf.mxu0
          %894 = vdwg.mxu0
          %896 = vrot.lane.b32.xlu0 %v809, 64
          %v897 = vpop.permute.xlu0 %896
          %v906 = vunpack.c.l.b16 %v788
          %v907 = vunpack.c.h.b16 %v788
          %v908 = vunpack.c.l.b16 %v789
          %v909 = vunpack.c.h.b16 %v789
          %v910 = vunpack.c.l.b16 %v790
          %v911 = vunpack.c.h.b16 %v790
          %v912 = vunpack.c.l.b16 %v791
          %v913 = vunpack.c.h.b16 %v791
          %v914 = vunpack.c.l.b16 %v792
          %v915 = vunpack.c.h.b16 %v792
          %v916 = vunpack.c.l.b16 %v793
          %v917 = vunpack.c.h.b16 %v793
          %v918 = vunpack.c.l.b16 %v794
          %v919 = vunpack.c.h.b16 %v794
          %v920 = vunpack.c.l.b16 %v795
          %v921 = vunpack.c.h.b16 %v795
          %v922 = vpack.c.b16 %v908, %v906
          %v923 = vpack.c.b16 %v909, %v907
          %v924 = vpack.c.b16 %v912, %v910
          %v925 = vpack.c.b16 %v913, %v911
          %v926 = vpack.c.b16 %v916, %v914
          %v927 = vpack.c.b16 %v917, %v915
          %v928 = vpack.c.b16 %v920, %v918
          %v929 = vpack.c.b16 %v921, %v919
          %v939 = vsel %vm631, %v897, 0
          %941 = vmatprep.subr.bf16.mxu0 0
          %942 = vmatpush1.bf16.msra.mxu0 0
          %943 = vmatprep.subr.bf16.mxu0 0
          %944 = vmatpush1.bf16.msra.mxu0 0
          %945 = vmatprep.subr.bf16.mxu0 0
          %946 = vmatpush1.bf16.msra.mxu0 0
          %947 = vmatprep.subr.bf16.mxu0 0
          %948 = vmatpush1.bf16.msra.mxu0 0
          %949 = vmatprep.subr.bf16.mxu0 %v929
          %950 = vmatpush1.bf16.msra.mxu0 %v928
          %951 = vmatprep.subr.bf16.mxu0 %v927
          %952 = vmatpush1.bf16.msra.mxu0 %v926
          %953 = vmatprep.subr.bf16.mxu0 %v925
          %954 = vmatpush1.bf16.msra.mxu0 %v924
          %955 = vmatprep.subr.bf16.mxu0 %v923
          %956 = vmatpush1.bf16.msra.mxu0 %v922
          %957 = vmatprep.subr.bf16.mxu0 0
          %958 = vmatpush2.bf16.msra.mxu0 0
          %959 = vmatprep.subr.bf16.mxu0 0
          %960 = vmatpush2.bf16.msra.mxu0 0
          %961 = vmatprep.subr.bf16.mxu0 0
          %962 = vmatpush2.bf16.msra.mxu0 0
          %963 = vmatprep.subr.bf16.mxu0 0
          %964 = vmatpush2.bf16.msra.mxu0 0
          %965 = vmatprep.subr.bf16.mxu0 0
          %966 = vmatpush2.bf16.msra.mxu0 0
          %967 = vmatprep.subr.bf16.mxu0 0
          %968 = vmatpush2.bf16.msra.mxu0 0
          %969 = vmatprep.subr.bf16.mxu0 0
          %970 = vmatpush2.bf16.msra.mxu0 0
          %971 = vmatprep.subr.bf16.mxu0 0
          %972 = vmatpush2.bf16.msra.mxu0 0
          %973 = vmatprep.mubr.bf16.mxu0 0
          %974 = vmatmul.mubr.bf16.gmra.mxu0 %v939
          %v975 = vpop.f32.mrf.mxu0
          %v976 = vadd.f32 %v889, %v975
          %v977 = vpop.f32.mrf.mxu0
          %v978 = vadd.f32 %v891, %v977
          %v979 = vpop.f32.mrf.mxu0
          %v980 = vpop.f32.mrf.mxu0
          %981 = vdwg.mxu0
          %v983 = vlaneseq
          %v984 = vshrl.u32 %v983, 7
          %v985 = vsub.s32 0, %v984
          %v986 = vrot.slane %v804, %v985
          %v987 = vlaneseq
          %v988 = vshrl.u32 %v987, 7
          %v989 = vsub.s32 1, %v988
          %v990 = vrot.slane %v804, %v989
          %v993 = vadd.f32 %v976, %v986
          %v994 = vadd.f32 %v978, %v990
          %v995 = vsub.f32 0.0, %v993
          %v996 = vmul.f32 %v995, 1.442695
          %v997 = vpow.pop %v996
          %v998 = vadd.f32 %v997, 1.0
          %v999 = vrcp.pop %v998
          %v1000 = vtanh.pop %v994
          %v1001 = vsub.f32 0.0, %v994
          %v1002 = vmul.f32 %v1001, 1.442695
          %v1003 = vpow.pop %v1002
          %v1004 = vadd.f32 %v1003, 1.0
          %v1005 = vrcp.pop %v1004
          %1007 = vrot.lane.b32.xlu0 %v808, 64
          %v1008 = vpop.permute.xlu0 %1007
          %v1010 = vmul.f32 %v999, %v1008
          %v1011 = vmul.f32 %v999, %v1000
          %1013 = vrot.lane.b32.xlu0 %v1011, 64
          %v1014 = vpop.permute.xlu0 %1013
          %v1016 = vadd.f32 %v1010, %v1014
          %v1017 = vtanh.pop %v1016
          %v1018 = vmul.f32 %v1005, %v1017
          %1020 = vrot.lane.b32.xlu0 %v1018, 64
          %v1021 = vpop.permute.xlu0 %1020
          %s1023 = scalar_lea.vmem [#allocation18], 8
          %1024 = vst.msk [vmem:[%s1023] sm:$0xff] %vm631, %v1021
          %1026 = vrot.lane.b32.xlu0 %v1016, 64
          %v1027 = vpop.permute.xlu0 %1026
          %s1029 = scalar_lea.vmem [#allocation20], 8
          %1030 = vst.msk [vmem:[%s1029] sm:$0xff] %vm631, %v1027
          %1031 = vst.msk [vmem:[#allocation2] sm:$0xff] %vm631, %v1021
        $region100: #{tpu_custom_call.1} parent=63 // pred_fallthru
          _
        %v1032 = vld [vmem:[#allocation2] sm:$0xff]
        %v1033 = vpack.c.bf16 %v1032, %v1032
        %v1034 = vld [vmem:[%s519] sm:$0xf]
        %v1035 = vld [vmem:[%s519 + $0x4] sm:$0xf]
        %v1036 = vld [vmem:[%s519 + $0x8] sm:$0xf]
        %v1037 = vld [vmem:[%s519 + $0xc] sm:$0xf]
        %v1038 = vld [vmem:[%s519 + $0x10] sm:$0xf]
        %v1039 = vld [vmem:[%s519 + $0x14] sm:$0xf]
        %v1040 = vld [vmem:[%s519 + $0x18] sm:$0xf]
        %v1041 = vld [vmem:[%s519 + $0x1c] sm:$0xf]
        %v1042 = vld [vmem:[%s567] sm:$0x1]
        %v1044 = vlaneseq
        %v1045 = vshrl.u32 %v1044, 7
        %v1046 = vsub.s32 0, %v1045
        %v1047 = vrot.slane %v1042, %v1046
        %v1057 = vunpack.c.l.b16 %v1034
        %v1058 = vunpack.c.l.b16 %v1035
        %v1059 = vunpack.c.l.b16 %v1036
        %v1060 = vunpack.c.l.b16 %v1037
        %v1061 = vunpack.c.l.b16 %v1038
        %v1062 = vunpack.c.l.b16 %v1039
        %v1063 = vunpack.c.l.b16 %v1040
        %v1064 = vunpack.c.l.b16 %v1041
        %v1065 = vpack.c.b16 %v1058, %v1057
        %v1066 = vpack.c.b16 %v1060, %v1059
        %v1067 = vpack.c.b16 %v1062, %v1061
        %v1068 = vpack.c.b16 %v1064, %v1063
        %vm1073 = vcmask 523264
        %v1075 = vsel %vm1073, %v1033, 0
        %1077 = vmatprep.subr.bf16.mxu0 0
        %1078 = vmatpush1.bf16.msra.mxu0 0
        %1079 = vmatprep.subr.bf16.mxu0 0
        %1080 = vmatpush1.bf16.msra.mxu0 0
        %1081 = vmatprep.subr.bf16.mxu0 0
        %1082 = vmatpush1.bf16.msra.mxu0 0
        %1083 = vmatprep.subr.bf16.mxu0 0
        %1084 = vmatpush1.bf16.msra.mxu0 0
        %1085 = vmatprep.subr.bf16.mxu0 0
        %1086 = vmatpush1.bf16.msra.mxu0 %v1068
        %1087 = vmatprep.subr.bf16.mxu0 0
        %1088 = vmatpush1.bf16.msra.mxu0 %v1067
        %1089 = vmatprep.subr.bf16.mxu0 0
        %1090 = vmatpush1.bf16.msra.mxu0 %v1066
        %1091 = vmatprep.subr.bf16.mxu0 0
        %1092 = vmatpush1.bf16.msra.mxu0 %v1065
        %1093 = vmatprep.subr.bf16.mxu0 0
        %1094 = vmatpush2.bf16.msra.mxu0 0
        %1095 = vmatprep.subr.bf16.mxu0 0
        %1096 = vmatpush2.bf16.msra.mxu0 0
        %1097 = vmatprep.subr.bf16.mxu0 0
        %1098 = vmatpush2.bf16.msra.mxu0 0
        %1099 = vmatprep.subr.bf16.mxu0 0
        %1100 = vmatpush2.bf16.msra.mxu0 0
        %1101 = vmatprep.subr.bf16.mxu0 0
        %1102 = vmatpush2.bf16.msra.mxu0 0
        %1103 = vmatprep.subr.bf16.mxu0 0
        %1104 = vmatpush2.bf16.msra.mxu0 0
        %1105 = vmatprep.subr.bf16.mxu0 0
        %1106 = vmatpush2.bf16.msra.mxu0 0
        %1107 = vmatprep.subr.bf16.mxu0 0
        %1108 = vmatpush2.bf16.msra.mxu0 0
        %1109 = vmatprep.mubr.bf16.mxu0 0
        %1110 = vmatmul.mubr.bf16.gmra.mxu0 %v1075
        %v1111 = vpop.f32.mrf.mxu0
        %v1112 = vadd.f32 %v1047, %v1111
        %v1113 = vpop.f32.mrf.mxu0
        %v1114 = vpop.f32.mrf.mxu0
        %v1115 = vpop.f32.mrf.mxu0
        %1116 = vdwg.mxu0
        %1117 = vst [vmem:[%s560] sm:$0xff] %v1112
        %s1118 = sand.u32 %s285, 1
        %s1119 = scalar_lea.sflag [#allocation5], %s1118
        %s1120 = sand.u32 %s285, 1
        %s1121 = smul.addr %s1120, 8
        %s1122 = scalar_lea.vmem [#allocation17], %s1121
        // Predicated region
        $region101: #{tpu_custom_call.1} parent=63 // pred_check
          %p1123 = pneg %p295
        $region102: #{tpu_custom_call.1} parent=63 // pred_check_branch
          %1125 = sbr.rel (%p1123) target = $region104
        $region103: #{tpu_custom_call.1} parent=63 // pred_region
          %s1127 = ssub.s32 128, 128
          %1128 = vsyncadd %s1119, %s1127
          %s1129 = smul.addr %s36, 128
          %s1130 = scalar_lea.hbm %s11, %s1129
          %s1132 = sshll.u32 %s1122, 4
          %s1133 = int_to_ptr.vmem [resolvable:$true] %s1132
          %1135 = dma.vmem_to_hbm [thread:$0]  %s1133, 128, %s1130, %s1119
        $region104: #{tpu_custom_call.1} parent=63 // pred_fallthru
          _
        // Predicated region
        $region105: #{tpu_custom_call.1} parent=63 // pred_check
          %p1136 = pneg %p316
        $region106: #{tpu_custom_call.1} parent=63 // pred_check_branch
          %1138 = sbr.rel (%p1136) target = $region108
        $region107: #{tpu_custom_call.1} parent=63 // pred_region
          %s1140 = ssub.s32 256, 256
          %1141 = vsyncadd [#allocation19], %s1140
          %s1142 = sshll.u32 [#allocation18], 4
          %s1143 = int_to_ptr.vmem [resolvable:$true] %s1142
          %1148 = dma.vmem_to_hbm [thread:$0]  %s1143, 256, %s12, [#allocation19], 128, 128, 8
        $region108: #{tpu_custom_call.1} parent=63 // pred_fallthru
          _
        // Predicated region
        $region109: #{tpu_custom_call.1} parent=63 // pred_check
          %p1149 = pneg %p337
        $region110: #{tpu_custom_call.1} parent=63 // pred_check_branch
          %1151 = sbr.rel (%p1149) target = $region112
        $region111: #{tpu_custom_call.1} parent=63 // pred_region
          %s1153 = ssub.s32 256, 256
          %1154 = vsyncadd [#allocation19], %s1153
          %s1155 = sshll.u32 [#allocation20], 4
          %s1156 = int_to_ptr.vmem [resolvable:$true] %s1155
          %1161 = dma.vmem_to_hbm [thread:$0]  %s1156, 256, %s13, [#allocation19], 128, 128, 8
        $region112: #{tpu_custom_call.1} parent=63 // pred_fallthru
          _
        // Predicated region
        $region113: #{tpu_custom_call.1} parent=63 // pred_check
          %p1162 = pneg %p316
        $region114: #{tpu_custom_call.1} parent=63 // pred_check_branch
          %1164 = sbr.rel (%p1162) target = $region116
        $region115: #{tpu_custom_call.1} parent=63 // pred_region
          %1165 = dma.done [#allocation19], 256
        $region116: #{tpu_custom_call.1} parent=63 // pred_fallthru
          _
        // Predicated region
        $region117: #{tpu_custom_call.1} parent=63 // pred_check
          %p1166 = pneg %p337
        $region118: #{tpu_custom_call.1} parent=63 // pred_check_branch
          %1168 = sbr.rel (%p1166) target = $region120
        $region119: #{tpu_custom_call.1} parent=63 // pred_region
          %1169 = dma.done [#allocation19], 256
        $region120: #{tpu_custom_call.1} parent=63 // pred_fallthru
          _
      $region64: #{tpu_custom_call.1} parent=5 // pred_fallthru
        _
      %p1170 = scmp.le.s32.totalorder 2, %s31
      // Predicated region
      $region121: #{tpu_custom_call.1} parent=5 // pred_check
        %p1171 = pneg %p1170
      $region122: #{tpu_custom_call.1} parent=5 // pred_check_branch
        %1173 = sbr.rel (%p1171) target = $region124
      $region123: #{tpu_custom_call.1} parent=5 // pred_region
        %s1174 = ssub.s32 %s31, 2
        // Predicated region
        $region125: #{tpu_custom_call.1} parent=123 // pred_check
          %p1175 = pneg %p301
        $region126: #{tpu_custom_call.1} parent=123 // pred_check_branch
          %1177 = sbr.rel (%p1175) target = $region128
        $region127: #{tpu_custom_call.1} parent=123 // pred_region
          %s1178 = sand.u32 %s286, 1
          %s1179 = scalar_lea.sflag [#allocation5], %s1178
          %s1180 = sand.u32 %s286, 1
          %s1181 = smul.addr %s1180, 8
          %s1182 = scalar_lea.vmem [#allocation17], %s1181
          %1183 = dma.done %s1179, 128
        $region128: #{tpu_custom_call.1} parent=123 // pred_fallthru
          _
      $region124: #{tpu_custom_call.1} parent=5 // pred_fallthru
        _
    $region6: #{tpu_custom_call.1} parent=1 // loop_footer
      %s35 = sadd.s32 1, %s31
    $region7: #{tpu_custom_call.1} parent=1 // loop_footer_branch
      %30 = sbr.rel target = $region3
    $region8: #{tpu_custom_call.1} parent=1 // loop_exit
      _
    %1184 = vsyncpa [#allocation4], 1
    %s1185 = scalar_lea.sflag [#allocation4], 1
    %1186 = vsyncpa %s1185, 1
    %1187 = vsyncpa [#allocation7], 1
    %1188 = vsyncpa [#allocation10], 1
    %1189 = vsyncpa [#allocation13], 1
    %1190 = vsyncpa [#allocation16], 1
    %s1191 = scalar_lea.sflag [#allocation16], 1
    %1192 = vsyncpa %s1191, 1
    %1193 = vsyncpa [#allocation5], 1
    %s1194 = scalar_lea.sflag [#allocation5], 1
    %1195 = vsyncpa %s1194, 1
    %1196 = vsyncpa [#allocation19], 1

</llo_original>
